<compile_context>
chip_gen: v5e
topology: v5e:2x2
jax: 0.10.0
libtpu: 0.0.40
codegen_flags: <defaults>
</compile_context>

<pallas_src>
import jax
import jax.numpy as jnp
import numpy as np
from jax.experimental import pallas as pl
from jax.experimental.pallas import tpu as pltpu


# --------------------------------------------------------------------------
# Fused forward kernel: conv1-matmul + conv2 (selection matmuls) + fc1 + fc2
# --------------------------------------------------------------------------
def _vizconv_fused_kernel(p1_ref, w1_ref, b1_ref, sel_ref, w2_ref, b2_ref,
                          w3_ref, b3_ref, w4_ref, b4_ref, out_ref):
    f32 = jnp.float32
    bf16 = jnp.bfloat16

    # ---- conv1: (P1, K1) @ (K1, 8) + bias, ReLU -------------------------
    f1 = jnp.dot(p1_ref[0], w1_ref[...], preferred_element_type=f32)
    f1 = jnp.maximum(f1 + b1_ref[...], 0.0)            # (P1, 8) f32
    f1b = f1.astype(bf16)

    # ---- conv2: sum over the 3x3 kernel positions of (S_ij @ f1) @ W2_ij
    #      (S_ij are constant 0/1 selection matrices -> in-kernel im2col) --
    kk2, p2n, _ = sel_ref.shape                        # (9, 9, P1)
    c2out = w2_ref.shape[2]                            # 16
    acc2 = jnp.zeros((p2n, c2out), f32)
    for ij in range(kk2):                              # 9 static iterations
        patch = jnp.dot(sel_ref[ij], f1b,
                        preferred_element_type=f32)    # (P2, 8)
        acc2 = acc2 + jnp.dot(patch.astype(bf16), w2_ref[ij],
                              preferred_element_type=f32)   # (P2, 16)
    f2 = jnp.maximum(acc2 + b2_ref[...], 0.0)          # (P2, 16) f32

    # ---- fc1: torch's NCHW flatten (index = c*P2 + p) is absorbed into
    #      W3's (p, c, hidden) layout, so we just sum over spatial rows. ----
    hidden = w3_ref.shape[2]
    h = jnp.zeros((1, hidden), f32)
    for p in range(p2n):                               # 9 static iterations
        row = f2[p:p + 1, :].astype(bf16)              # (1, 16)
        h = h + jnp.dot(row, w3_ref[p], preferred_element_type=f32)
    h = jnp.maximum(h + b3_ref[...], 0.0)              # (1, hidden) f32

    # ---- fc2 (no activation) --------------------------------------------
    out = jnp.dot(h.astype(bf16), w4_ref[...], preferred_element_type=f32)
    out_ref[0] = (out + b4_ref[...]).astype(out_ref.dtype)   # (1, actions)


# --------------------------------------------------------------------------
# Host-side helpers
# --------------------------------------------------------------------------
def _im2col_nhwc(x_nhwc, k, stride):
    """x: (B, H, W, C) -> (B, Ho*Wo, k*k*C); feature order (kh, kw, c)."""
    B, H, W, C = x_nhwc.shape
    Ho = (H - k) // stride + 1
    Wo = (W - k) // stride + 1
    cols = []
    for i in range(k):
        for j in range(k):
            cols.append(
                x_nhwc[:, i:i + stride * Ho:stride, j:j + stride * Wo:stride, :])
    p = jnp.stack(cols, axis=3)                        # (B, Ho, Wo, k*k, C)
    return p.reshape(B, Ho * Wo, k * k * C)


def _conv_selection(h1, w1, h2, w2, k, stride):
    """0/1 matrices S[ij, p2, p1] gathering conv input rows for each kernel
    position ij of a (k x k, stride) conv over an (h1, w1) feature map."""
    sel = np.zeros((k * k, h2 * w2, h1 * w1), np.float32)
    for i in range(k):
        for j in range(k):
            ij = i * k + j
            for oh in range(h2):
                for ow in range(w2):
                    src = (oh * stride + i) * w1 + (ow * stride + j)
                    sel[ij, oh * w2 + ow, src] = 1.0
    return sel


# --------------------------------------------------------------------------
# VizConvNet in JAX/Pallas
# --------------------------------------------------------------------------
class VizConvNetPallas:
    def __init__(self, n_channels, hidden_units, available_actions_count,
                 resolution, key):
        self.channels = n_channels
        self.hidden = hidden_units
        self.actions = available_actions_count
        # Same (quirky) size arithmetic as the PyTorch module.
        self.dim0 = ((resolution[0] - 6) // 3 + 1 - 3) // 2 + 1
        self.dim1 = ((resolution[1] - 3) // 3 + 1 - 3) // 2 + 1
        # Actual conv output sizes.
        self.h1 = (resolution[0] - 6) // 3 + 1
        self.w1_sz = (resolution[1] - 6) // 3 + 1
        self.h2 = (self.h1 - 3) // 2 + 1
        self.w2_sz = (self.w1_sz - 3) // 2 + 1
        flat = self.dim0 * self.dim1 * 16
        assert flat == self.h2 * self.w2_sz * 16, (
            "resolution must make the module's fc1 sizing self-consistent "
            "(e.g. (24, 24))")

        ks = jax.random.split(key, 8)

        def u(k, shape, fan_in):
            bound = 1.0 / jnp.sqrt(jnp.float32(fan_in))
            return jax.random.uniform(k, shape, jnp.float32, -bound, bound)

        # PyTorch-layout parameters (kept for the pure-JAX reference check).
        w1 = u(ks[0], (8, n_channels, 6, 6), n_channels * 36)
        b1 = u(ks[1], (8,), n_channels * 36)
        w2 = u(ks[2], (16, 8, 3, 3), 8 * 9)
        b2 = u(ks[3], (16,), 8 * 9)
        w3 = u(ks[4], (hidden_units, flat), flat)
        b3 = u(ks[5], (hidden_units,), flat)
        w4 = u(ks[6], (available_actions_count, hidden_units), hidden_units)
        b4 = u(ks[7], (available_actions_count,), hidden_units)
        self._torch_params = (w1, b1, w2, b2, w3, b3, w4, b4)

        # ---- Precompute kernel-ready layouts ONCE (perf review item) -----
        # conv1 weight -> (6*6*Cin, 8); rows ordered (kh, kw, c) to match
        # _im2col_nhwc's feature order.
        self.w1m = jnp.asarray(
            w1.transpose(2, 3, 1, 0).reshape(36 * n_channels, 8), jnp.bfloat16)
        self.b1r = b1.reshape(1, 8).astype(jnp.float32)
        # conv2 weight -> (9, 8, 16): [kernel-pos ij, c_in, c_out].
        self.w2m = jnp.asarray(
            w2.transpose(2, 3, 1, 0).reshape(9, 8, 16), jnp.bfloat16)
        self.b2r = b2.reshape(1, 16).astype(jnp.float32)
        # conv2 spatial gather as constant 0/1 selection matrices.
        self.sel = jnp.asarray(
            _conv_selection(self.h1, self.w1_sz, self.h2, self.w2_sz, 3, 2),
            jnp.bfloat16)
        # fc1 weight -> (P2, 16, hidden): torch's NCHW flatten index c*P2 + p
        # is absorbed here, so no flatten/transpose at runtime.
        p2 = self.h2 * self.w2_sz
        self.w3m = jnp.asarray(
            w3.reshape(hidden_units, 16, p2).transpose(2, 1, 0), jnp.bfloat16)
        self.b3r = b3.reshape(1, hidden_units).astype(jnp.float32)
        # fc2 weight -> (hidden, actions).
        self.w4m = jnp.asarray(w4.T, jnp.bfloat16)
        self.b4r = b4.reshape(1, available_actions_count).astype(jnp.float32)

        # Per-batch-element cost (advisory scheduling hint).
        P1, K1 = self.h1 * self.w1_sz, 36 * n_channels
        self._flops_per_b = (2 * P1 * K1 * 8
                             + 9 * (2 * p2 * P1 * 8 + 2 * p2 * 8 * 16)
                             + p2 * 2 * 16 * hidden_units
                             + 2 * hidden_units * available_actions_count)
        self._w_bytes = int(
            2 * (self.w1m.size + self.sel.size + self.w2m.size
                 + self.w3m.size + self.w4m.size)
            + 4 * (self.b1r.size + self.b2r.size + self.b3r.size
                   + self.b4r.size))

    # ---------------------------------------------------------------------
    def __call__(self, x):
        """x: (B, C, H, W) float32 (PyTorch NCHW layout)."""
        B = x.shape[0]
        P1, P2 = self.h1 * self.w1_sz, self.h2 * self.w2_sz
        K1 = 36 * self.channels

        # conv1 im2col: the only XLA glue left (one transpose + strided
        # slices); bf16 cast halves HBM traffic into the kernel.
        # TODO(synk): move conv1's im2col in-kernel via strided ref reads once
        # the (Ho,Wo,C)->(Ho*Wo,C) in-kernel reshape is worth the risk.
        x_nhwc = x.transpose(0, 2, 3, 1).astype(jnp.bfloat16)
        p1 = _im2col_nhwc(x_nhwc, 6, 3)                 # (B, P1, K1) bf16

        cost = pl.CostEstimate(
            flops=int(B * self._flops_per_b),
            transcendentals=0,
            bytes_accessed=int(p1.size * 2 + self._w_bytes
                               + B * self.actions * 4))

        out = pl.pallas_call(
            _vizconv_fused_kernel,
            out_shape=jax.ShapeDtypeStruct((B, 1, self.actions), jnp.float32),
            grid=(B,),
            in_specs=[
                pl.BlockSpec((1, P1, K1), lambda b: (b, 0, 0)),
                pl.BlockSpec(self.w1m.shape, lambda b: (0, 0)),
                pl.BlockSpec(self.b1r.shape, lambda b: (0, 0)),
                pl.BlockSpec(self.sel.shape, lambda b: (0, 0, 0)),
                pl.BlockSpec(self.w2m.shape, lambda b: (0, 0, 0)),
                pl.BlockSpec(self.b2r.shape, lambda b: (0, 0)),
                pl.BlockSpec(self.w3m.shape, lambda b: (0, 0, 0)),
                pl.BlockSpec(self.b3r.shape, lambda b: (0, 0)),
                pl.BlockSpec(self.w4m.shape, lambda b: (0, 0)),
                pl.BlockSpec(self.b4r.shape, lambda b: (0, 0)),
            ],
            out_specs=pl.BlockSpec((1, 1, self.actions), lambda b: (b, 0, 0)),
            compiler_params=pltpu.CompilerParams(
                dimension_semantics=("parallel",)),
            cost_estimate=cost,
        )(p1, self.w1m, self.b1r, self.sel, self.w2m, self.b2r,
          self.w3m, self.b3r, self.w4m, self.b4r)
        return out.reshape(B, self.actions)

    # ---------------------------------------------------------------------
    def reference(self, x):
        """Pure-JAX f32 reference with PyTorch semantics (for validation)."""
        w1, b1, w2, b2, w3, b3, w4, b4 = self._torch_params
        y = jax.lax.conv_general_dilated(
            x, w1, window_strides=(3, 3), padding="VALID",
            dimension_numbers=("NCHW", "OIHW", "NCHW"))
        y = jnp.maximum(y + b1[None, :, None, None], 0.0)
        y = jax.lax.conv_general_dilated(
            y, w2, window_strides=(2, 2), padding="VALID",
            dimension_numbers=("NCHW", "OIHW", "NCHW"))
        y = jnp.maximum(y + b2[None, :, None, None], 0.0)
        y = y.reshape(x.shape[0], -1)                   # torch NCHW .view
        y = jnp.maximum(y @ w3.T + b3, 0.0)
        return y @ w4.T + b4


# --------------------------------------------------------------------------
if __name__ == "__main__":
    key = jax.random.PRNGKey(0)
    k_x, k_p = jax.random.split(key)

    # Small shapes consistent with the module.  resolution=(24,24) makes the
    # module's own fc1 input-size formula agree with the true conv output.
    B, C = 2, 4
    resolution = (24, 24)
    hidden_units = 32
    n_actions = 6

    model = VizConvNetPallas(C, hidden_units, n_actions, resolution, k_p)
    x = jax.random.normal(k_x, (B, C, resolution[0], resolution[1]),
                          dtype=jnp.float32)

    fwd = jax.jit(model.__call__)
    out = jax.block_until_ready(fwd(x))

    assert out.shape == (B, n_actions), out.shape
    assert bool(jnp.all(jnp.isfinite(out)))
    ref = model.reference(x)
    assert bool(jnp.allclose(out, ref, atol=5e-2, rtol=5e-2)), (
        "fused Pallas forward diverged from reference")
    print("KERNEL_OK")
</pallas_src>

<mosaic_0001>
module attributes {stable_mosaic.version = 11 : i64} {
  func.func @_vizconv_fused_kernel(%arg0: i32, %arg1: memref<1x49x144xbf16, #tpu.memory_space<vmem>>, %arg2: memref<144x8xbf16, #tpu.memory_space<vmem>>, %arg3: memref<1x8xf32, #tpu.memory_space<vmem>>, %arg4: memref<9x9x49xbf16, #tpu.memory_space<vmem>>, %arg5: memref<9x8x16xbf16, #tpu.memory_space<vmem>>, %arg6: memref<1x16xf32, #tpu.memory_space<vmem>>, %arg7: memref<9x16x32xbf16, #tpu.memory_space<vmem>>, %arg8: memref<1x32xf32, #tpu.memory_space<vmem>>, %arg9: memref<32x6xbf16, #tpu.memory_space<vmem>>, %arg10: memref<1x6xf32, #tpu.memory_space<vmem>>, %arg11: memref<1x1x6xf32, #tpu.memory_space<vmem>>) attributes {dimension_semantics = [#tpu.dimension_semantics<parallel>], iteration_bounds = array<i64: 2>, scalar_prefetch = 0 : i64, scratch_operands = 0 : i64, tpu.core_type = #tpu.core_type<tc>, window_params = [{transform_indices = @transform_0, window_bounds = array<i64: 1, 49, 144>}, {pipeline_mode = #tpu.pipeline_mode<synchronous>, transform_indices = @transform_1, window_bounds = array<i64: 144, 8>}, {pipeline_mode = #tpu.pipeline_mode<synchronous>, transform_indices = @transform_2, window_bounds = array<i64: 1, 8>}, {pipeline_mode = #tpu.pipeline_mode<synchronous>, transform_indices = @transform_3, window_bounds = array<i64: 9, 9, 49>}, {pipeline_mode = #tpu.pipeline_mode<synchronous>, transform_indices = @transform_4, window_bounds = array<i64: 9, 8, 16>}, {pipeline_mode = #tpu.pipeline_mode<synchronous>, transform_indices = @transform_5, window_bounds = array<i64: 1, 16>}, {pipeline_mode = #tpu.pipeline_mode<synchronous>, transform_indices = @transform_6, window_bounds = array<i64: 9, 16, 32>}, {pipeline_mode = #tpu.pipeline_mode<synchronous>, transform_indices = @transform_7, window_bounds = array<i64: 1, 32>}, {pipeline_mode = #tpu.pipeline_mode<synchronous>, transform_indices = @transform_8, window_bounds = array<i64: 32, 6>}, {pipeline_mode = #tpu.pipeline_mode<synchronous>, transform_indices = @transform_9, window_bounds = array<i64: 1, 6>}, {transform_indices = @transform_10, window_bounds = array<i64: 1, 1, 6>}]} {
    %c0 = arith.constant 0 : index
    %c0_0 = arith.constant 0 : index
    %c0_1 = arith.constant 0 : index
    %0 = vector.load %arg1[%c0, %c0_0, %c0_1] : memref<1x49x144xbf16, #tpu.memory_space<vmem>>, vector<1x49x144xbf16>
    %1 = vector.shape_cast %0 : vector<1x49x144xbf16> to vector<49x144xbf16>
    %c0_2 = arith.constant 0 : index
    %c0_3 = arith.constant 0 : index
    %2 = vector.load %arg2[%c0_2, %c0_3] : memref<144x8xbf16, #tpu.memory_space<vmem>>, vector<144x8xbf16>
    %cst = arith.constant dense<0.000000e+00> : vector<49x8xf32>
    %3 = tpu.matmul %1, %2, %cst {dimension_numbers = #tpu.dot_dimension_numbers<[1], [0], [0], [1], [0, 0, 1, 1], [], []>} : vector<49x144xbf16>, vector<144x8xbf16>, vector<49x8xf32> -> vector<49x8xf32>
    %c0_4 = arith.constant 0 : index
    %c0_5 = arith.constant 0 : index
    %4 = vector.load %arg3[%c0_4, %c0_5] : memref<1x8xf32, #tpu.memory_space<vmem>>, vector<1x8xf32>
    %5 = vector.broadcast %4 : vector<1x8xf32> to vector<49x8xf32>
    %6 = arith.addf %3, %5 : vector<49x8xf32>
    %cst_6 = arith.constant 0.000000e+00 : f32
    %7 = vector.broadcast %cst_6 : f32 to vector<49x8xf32>
    %8 = arith.maximumf %6, %7 : vector<49x8xf32>
    %9 = arith.truncf %8 : vector<49x8xf32> to vector<49x8xbf16>
    %cst_7 = arith.constant 0.000000e+00 : f32
    %10 = vector.broadcast %cst_7 : f32 to vector<9x16xf32>
    %c0_8 = arith.constant 0 : index
    %c0_9 = arith.constant 0 : index
    %c0_10 = arith.constant 0 : index
    %11 = vector.load %arg4[%c0_8, %c0_9, %c0_10] : memref<9x9x49xbf16, #tpu.memory_space<vmem>>, vector<1x9x49xbf16>
    %12 = vector.shape_cast %11 : vector<1x9x49xbf16> to vector<9x49xbf16>
    %cst_11 = arith.constant dense<0.000000e+00> : vector<9x8xf32>
    %13 = tpu.matmul %12, %9, %cst_11 {dimension_numbers = #tpu.dot_dimension_numbers<[1], [0], [0], [1], [0, 0, 1, 1], [], []>} : vector<9x49xbf16>, vector<49x8xbf16>, vector<9x8xf32> -> vector<9x8xf32>
    %14 = arith.truncf %13 : vector<9x8xf32> to vector<9x8xbf16>
    %c0_12 = arith.constant 0 : index
    %c0_13 = arith.constant 0 : index
    %c0_14 = arith.constant 0 : index
    %15 = vector.load %arg5[%c0_12, %c0_13, %c0_14] : memref<9x8x16xbf16, #tpu.memory_space<vmem>>, vector<1x8x16xbf16>
    %16 = vector.shape_cast %15 : vector<1x8x16xbf16> to vector<8x16xbf16>
    %cst_15 = arith.constant dense<0.000000e+00> : vector<9x16xf32>
    %17 = tpu.matmul %14, %16, %cst_15 {dimension_numbers = #tpu.dot_dimension_numbers<[1], [0], [0], [1], [0, 0, 1, 1], [], []>} : vector<9x8xbf16>, vector<8x16xbf16>, vector<9x16xf32> -> vector<9x16xf32>
    %18 = arith.addf %10, %17 : vector<9x16xf32>
    %c1 = arith.constant 1 : index
    %c0_16 = arith.constant 0 : index
    %c0_17 = arith.constant 0 : index
    %19 = vector.load %arg4[%c1, %c0_16, %c0_17] : memref<9x9x49xbf16, #tpu.memory_space<vmem>>, vector<1x9x49xbf16>
    %20 = vector.shape_cast %19 : vector<1x9x49xbf16> to vector<9x49xbf16>
    %cst_18 = arith.constant dense<0.000000e+00> : vector<9x8xf32>
    %21 = tpu.matmul %20, %9, %cst_18 {dimension_numbers = #tpu.dot_dimension_numbers<[1], [0], [0], [1], [0, 0, 1, 1], [], []>} : vector<9x49xbf16>, vector<49x8xbf16>, vector<9x8xf32> -> vector<9x8xf32>
    %22 = arith.truncf %21 : vector<9x8xf32> to vector<9x8xbf16>
    %c1_19 = arith.constant 1 : index
    %c0_20 = arith.constant 0 : index
    %c0_21 = arith.constant 0 : index
    %23 = vector.load %arg5[%c1_19, %c0_20, %c0_21] : memref<9x8x16xbf16, #tpu.memory_space<vmem>>, vector<1x8x16xbf16>
    %24 = vector.shape_cast %23 : vector<1x8x16xbf16> to vector<8x16xbf16>
    %cst_22 = arith.constant dense<0.000000e+00> : vector<9x16xf32>
    %25 = tpu.matmul %22, %24, %cst_22 {dimension_numbers = #tpu.dot_dimension_numbers<[1], [0], [0], [1], [0, 0, 1, 1], [], []>} : vector<9x8xbf16>, vector<8x16xbf16>, vector<9x16xf32> -> vector<9x16xf32>
    %26 = arith.addf %18, %25 : vector<9x16xf32>
    %c2 = arith.constant 2 : index
    %c0_23 = arith.constant 0 : index
    %c0_24 = arith.constant 0 : index
    %27 = vector.load %arg4[%c2, %c0_23, %c0_24] : memref<9x9x49xbf16, #tpu.memory_space<vmem>>, vector<1x9x49xbf16>
    %28 = vector.shape_cast %27 : vector<1x9x49xbf16> to vector<9x49xbf16>
    %cst_25 = arith.constant dense<0.000000e+00> : vector<9x8xf32>
    %29 = tpu.matmul %28, %9, %cst_25 {dimension_numbers = #tpu.dot_dimension_numbers<[1], [0], [0], [1], [0, 0, 1, 1], [], []>} : vector<9x49xbf16>, vector<49x8xbf16>, vector<9x8xf32> -> vector<9x8xf32>
    %30 = arith.truncf %29 : vector<9x8xf32> to vector<9x8xbf16>
    %c2_26 = arith.constant 2 : index
    %c0_27 = arith.constant 0 : index
    %c0_28 = arith.constant 0 : index
    %31 = vector.load %arg5[%c2_26, %c0_27, %c0_28] : memref<9x8x16xbf16, #tpu.memory_space<vmem>>, vector<1x8x16xbf16>
    %32 = vector.shape_cast %31 : vector<1x8x16xbf16> to vector<8x16xbf16>
    %cst_29 = arith.constant dense<0.000000e+00> : vector<9x16xf32>
    %33 = tpu.matmul %30, %32, %cst_29 {dimension_numbers = #tpu.dot_dimension_numbers<[1], [0], [0], [1], [0, 0, 1, 1], [], []>} : vector<9x8xbf16>, vector<8x16xbf16>, vector<9x16xf32> -> vector<9x16xf32>
    %34 = arith.addf %26, %33 : vector<9x16xf32>
    %c3 = arith.constant 3 : index
    %c0_30 = arith.constant 0 : index
    %c0_31 = arith.constant 0 : index
    %35 = vector.load %arg4[%c3, %c0_30, %c0_31] : memref<9x9x49xbf16, #tpu.memory_space<vmem>>, vector<1x9x49xbf16>
    %36 = vector.shape_cast %35 : vector<1x9x49xbf16> to vector<9x49xbf16>
    %cst_32 = arith.constant dense<0.000000e+00> : vector<9x8xf32>
    %37 = tpu.matmul %36, %9, %cst_32 {dimension_numbers = #tpu.dot_dimension_numbers<[1], [0], [0], [1], [0, 0, 1, 1], [], []>} : vector<9x49xbf16>, vector<49x8xbf16>, vector<9x8xf32> -> vector<9x8xf32>
    %38 = arith.truncf %37 : vector<9x8xf32> to vector<9x8xbf16>
    %c3_33 = arith.constant 3 : index
    %c0_34 = arith.constant 0 : index
    %c0_35 = arith.constant 0 : index
    %39 = vector.load %arg5[%c3_33, %c0_34, %c0_35] : memref<9x8x16xbf16, #tpu.memory_space<vmem>>, vector<1x8x16xbf16>
    %40 = vector.shape_cast %39 : vector<1x8x16xbf16> to vector<8x16xbf16>
    %cst_36 = arith.constant dense<0.000000e+00> : vector<9x16xf32>
    %41 = tpu.matmul %38, %40, %cst_36 {dimension_numbers = #tpu.dot_dimension_numbers<[1], [0], [0], [1], [0, 0, 1, 1], [], []>} : vector<9x8xbf16>, vector<8x16xbf16>, vector<9x16xf32> -> vector<9x16xf32>
    %42 = arith.addf %34, %41 : vector<9x16xf32>
    %c4 = arith.constant 4 : index
    %c0_37 = arith.constant 0 : index
    %c0_38 = arith.constant 0 : index
    %43 = vector.load %arg4[%c4, %c0_37, %c0_38] : memref<9x9x49xbf16, #tpu.memory_space<vmem>>, vector<1x9x49xbf16>
    %44 = vector.shape_cast %43 : vector<1x9x49xbf16> to vector<9x49xbf16>
    %cst_39 = arith.constant dense<0.000000e+00> : vector<9x8xf32>
    %45 = tpu.matmul %44, %9, %cst_39 {dimension_numbers = #tpu.dot_dimension_numbers<[1], [0], [0], [1], [0, 0, 1, 1], [], []>} : vector<9x49xbf16>, vector<49x8xbf16>, vector<9x8xf32> -> vector<9x8xf32>
    %46 = arith.truncf %45 : vector<9x8xf32> to vector<9x8xbf16>
    %c4_40 = arith.constant 4 : index
    %c0_41 = arith.constant 0 : index
    %c0_42 = arith.constant 0 : index
    %47 = vector.load %arg5[%c4_40, %c0_41, %c0_42] : memref<9x8x16xbf16, #tpu.memory_space<vmem>>, vector<1x8x16xbf16>
    %48 = vector.shape_cast %47 : vector<1x8x16xbf16> to vector<8x16xbf16>
    %cst_43 = arith.constant dense<0.000000e+00> : vector<9x16xf32>
    %49 = tpu.matmul %46, %48, %cst_43 {dimension_numbers = #tpu.dot_dimension_numbers<[1], [0], [0], [1], [0, 0, 1, 1], [], []>} : vector<9x8xbf16>, vector<8x16xbf16>, vector<9x16xf32> -> vector<9x16xf32>
    %50 = arith.addf %42, %49 : vector<9x16xf32>
    %c5 = arith.constant 5 : index
    %c0_44 = arith.constant 0 : index
    %c0_45 = arith.constant 0 : index
    %51 = vector.load %arg4[%c5, %c0_44, %c0_45] : memref<9x9x49xbf16, #tpu.memory_space<vmem>>, vector<1x9x49xbf16>
    %52 = vector.shape_cast %51 : vector<1x9x49xbf16> to vector<9x49xbf16>
    %cst_46 = arith.constant dense<0.000000e+00> : vector<9x8xf32>
    %53 = tpu.matmul %52, %9, %cst_46 {dimension_numbers = #tpu.dot_dimension_numbers<[1], [0], [0], [1], [0, 0, 1, 1], [], []>} : vector<9x49xbf16>, vector<49x8xbf16>, vector<9x8xf32> -> vector<9x8xf32>
    %54 = arith.truncf %53 : vector<9x8xf32> to vector<9x8xbf16>
    %c5_47 = arith.constant 5 : index
    %c0_48 = arith.constant 0 : index
    %c0_49 = arith.constant 0 : index
    %55 = vector.load %arg5[%c5_47, %c0_48, %c0_49] : memref<9x8x16xbf16, #tpu.memory_space<vmem>>, vector<1x8x16xbf16>
    %56 = vector.shape_cast %55 : vector<1x8x16xbf16> to vector<8x16xbf16>
    %cst_50 = arith.constant dense<0.000000e+00> : vector<9x16xf32>
    %57 = tpu.matmul %54, %56, %cst_50 {dimension_numbers = #tpu.dot_dimension_numbers<[1], [0], [0], [1], [0, 0, 1, 1], [], []>} : vector<9x8xbf16>, vector<8x16xbf16>, vector<9x16xf32> -> vector<9x16xf32>
    %58 = arith.addf %50, %57 : vector<9x16xf32>
    %c6 = arith.constant 6 : index
    %c0_51 = arith.constant 0 : index
    %c0_52 = arith.constant 0 : index
    %59 = vector.load %arg4[%c6, %c0_51, %c0_52] : memref<9x9x49xbf16, #tpu.memory_space<vmem>>, vector<1x9x49xbf16>
    %60 = vector.shape_cast %59 : vector<1x9x49xbf16> to vector<9x49xbf16>
    %cst_53 = arith.constant dense<0.000000e+00> : vector<9x8xf32>
    %61 = tpu.matmul %60, %9, %cst_53 {dimension_numbers = #tpu.dot_dimension_numbers<[1], [0], [0], [1], [0, 0, 1, 1], [], []>} : vector<9x49xbf16>, vector<49x8xbf16>, vector<9x8xf32> -> vector<9x8xf32>
    %62 = arith.truncf %61 : vector<9x8xf32> to vector<9x8xbf16>
    %c6_54 = arith.constant 6 : index
    %c0_55 = arith.constant 0 : index
    %c0_56 = arith.constant 0 : index
    %63 = vector.load %arg5[%c6_54, %c0_55, %c0_56] : memref<9x8x16xbf16, #tpu.memory_space<vmem>>, vector<1x8x16xbf16>
    %64 = vector.shape_cast %63 : vector<1x8x16xbf16> to vector<8x16xbf16>
    %cst_57 = arith.constant dense<0.000000e+00> : vector<9x16xf32>
    %65 = tpu.matmul %62, %64, %cst_57 {dimension_numbers = #tpu.dot_dimension_numbers<[1], [0], [0], [1], [0, 0, 1, 1], [], []>} : vector<9x8xbf16>, vector<8x16xbf16>, vector<9x16xf32> -> vector<9x16xf32>
    %66 = arith.addf %58, %65 : vector<9x16xf32>
    %c7 = arith.constant 7 : index
    %c0_58 = arith.constant 0 : index
    %c0_59 = arith.constant 0 : index
    %67 = vector.load %arg4[%c7, %c0_58, %c0_59] : memref<9x9x49xbf16, #tpu.memory_space<vmem>>, vector<1x9x49xbf16>
    %68 = vector.shape_cast %67 : vector<1x9x49xbf16> to vector<9x49xbf16>
    %cst_60 = arith.constant dense<0.000000e+00> : vector<9x8xf32>
    %69 = tpu.matmul %68, %9, %cst_60 {dimension_numbers = #tpu.dot_dimension_numbers<[1], [0], [0], [1], [0, 0, 1, 1], [], []>} : vector<9x49xbf16>, vector<49x8xbf16>, vector<9x8xf32> -> vector<9x8xf32>
    %70 = arith.truncf %69 : vector<9x8xf32> to vector<9x8xbf16>
    %c7_61 = arith.constant 7 : index
    %c0_62 = arith.constant 0 : index
    %c0_63 = arith.constant 0 : index
    %71 = vector.load %arg5[%c7_61, %c0_62, %c0_63] : memref<9x8x16xbf16, #tpu.memory_space<vmem>>, vector<1x8x16xbf16>
    %72 = vector.shape_cast %71 : vector<1x8x16xbf16> to vector<8x16xbf16>
    %cst_64 = arith.constant dense<0.000000e+00> : vector<9x16xf32>
    %73 = tpu.matmul %70, %72, %cst_64 {dimension_numbers = #tpu.dot_dimension_numbers<[1], [0], [0], [1], [0, 0, 1, 1], [], []>} : vector<9x8xbf16>, vector<8x16xbf16>, vector<9x16xf32> -> vector<9x16xf32>
    %74 = arith.addf %66, %73 : vector<9x16xf32>
    %c8 = arith.constant 8 : index
    %c0_65 = arith.constant 0 : index
    %c0_66 = arith.constant 0 : index
    %75 = vector.load %arg4[%c8, %c0_65, %c0_66] : memref<9x9x49xbf16, #tpu.memory_space<vmem>>, vector<1x9x49xbf16>
    %76 = vector.shape_cast %75 : vector<1x9x49xbf16> to vector<9x49xbf16>
    %cst_67 = arith.constant dense<0.000000e+00> : vector<9x8xf32>
    %77 = tpu.matmul %76, %9, %cst_67 {dimension_numbers = #tpu.dot_dimension_numbers<[1], [0], [0], [1], [0, 0, 1, 1], [], []>} : vector<9x49xbf16>, vector<49x8xbf16>, vector<9x8xf32> -> vector<9x8xf32>
    %78 = arith.truncf %77 : vector<9x8xf32> to vector<9x8xbf16>
    %c8_68 = arith.constant 8 : index
    %c0_69 = arith.constant 0 : index
    %c0_70 = arith.constant 0 : index
    %79 = vector.load %arg5[%c8_68, %c0_69, %c0_70] : memref<9x8x16xbf16, #tpu.memory_space<vmem>>, vector<1x8x16xbf16>
    %80 = vector.shape_cast %79 : vector<1x8x16xbf16> to vector<8x16xbf16>
    %cst_71 = arith.constant dense<0.000000e+00> : vector<9x16xf32>
    %81 = tpu.matmul %78, %80, %cst_71 {dimension_numbers = #tpu.dot_dimension_numbers<[1], [0], [0], [1], [0, 0, 1, 1], [], []>} : vector<9x8xbf16>, vector<8x16xbf16>, vector<9x16xf32> -> vector<9x16xf32>
    %82 = arith.addf %74, %81 : vector<9x16xf32>
    %c0_72 = arith.constant 0 : index
    %c0_73 = arith.constant 0 : index
    %83 = vector.load %arg6[%c0_72, %c0_73] : memref<1x16xf32, #tpu.memory_space<vmem>>, vector<1x16xf32>
    %84 = vector.broadcast %83 : vector<1x16xf32> to vector<9x16xf32>
    %85 = arith.addf %82, %84 : vector<9x16xf32>
    %cst_74 = arith.constant 0.000000e+00 : f32
    %86 = vector.broadcast %cst_74 : f32 to vector<9x16xf32>
    %87 = arith.maximumf %85, %86 : vector<9x16xf32>
    %cst_75 = arith.constant 0.000000e+00 : f32
    %88 = vector.broadcast %cst_75 : f32 to vector<1x32xf32>
    %89 = vector.extract_strided_slice %87 {offsets = [0, 0], sizes = [1, 16], strides = [1, 1]} : vector<9x16xf32> to vector<1x16xf32>
    %90 = arith.truncf %89 : vector<1x16xf32> to vector<1x16xbf16>
    %c0_76 = arith.constant 0 : index
    %c0_77 = arith.constant 0 : index
    %c0_78 = arith.constant 0 : index
    %91 = vector.load %arg7[%c0_76, %c0_77, %c0_78] : memref<9x16x32xbf16, #tpu.memory_space<vmem>>, vector<1x16x32xbf16>
    %92 = vector.shape_cast %91 : vector<1x16x32xbf16> to vector<16x32xbf16>
    %cst_79 = arith.constant dense<0.000000e+00> : vector<1x32xf32>
    %93 = tpu.matmul %90, %92, %cst_79 {dimension_numbers = #tpu.dot_dimension_numbers<[1], [0], [0], [1], [0, 0, 1, 1], [], []>} : vector<1x16xbf16>, vector<16x32xbf16>, vector<1x32xf32> -> vector<1x32xf32>
    %94 = arith.addf %88, %93 : vector<1x32xf32>
    %95 = vector.extract_strided_slice %87 {offsets = [1, 0], sizes = [1, 16], strides = [1, 1]} : vector<9x16xf32> to vector<1x16xf32>
    %96 = arith.truncf %95 : vector<1x16xf32> to vector<1x16xbf16>
    %c1_80 = arith.constant 1 : index
    %c0_81 = arith.constant 0 : index
    %c0_82 = arith.constant 0 : index
    %97 = vector.load %arg7[%c1_80, %c0_81, %c0_82] : memref<9x16x32xbf16, #tpu.memory_space<vmem>>, vector<1x16x32xbf16>
    %98 = vector.shape_cast %97 : vector<1x16x32xbf16> to vector<16x32xbf16>
    %cst_83 = arith.constant dense<0.000000e+00> : vector<1x32xf32>
    %99 = tpu.matmul %96, %98, %cst_83 {dimension_numbers = #tpu.dot_dimension_numbers<[1], [0], [0], [1], [0, 0, 1, 1], [], []>} : vector<1x16xbf16>, vector<16x32xbf16>, vector<1x32xf32> -> vector<1x32xf32>
    %100 = arith.addf %94, %99 : vector<1x32xf32>
    %101 = vector.extract_strided_slice %87 {offsets = [2, 0], sizes = [1, 16], strides = [1, 1]} : vector<9x16xf32> to vector<1x16xf32>
    %102 = arith.truncf %101 : vector<1x16xf32> to vector<1x16xbf16>
    %c2_84 = arith.constant 2 : index
    %c0_85 = arith.constant 0 : index
    %c0_86 = arith.constant 0 : index
    %103 = vector.load %arg7[%c2_84, %c0_85, %c0_86] : memref<9x16x32xbf16, #tpu.memory_space<vmem>>, vector<1x16x32xbf16>
    %104 = vector.shape_cast %103 : vector<1x16x32xbf16> to vector<16x32xbf16>
    %cst_87 = arith.constant dense<0.000000e+00> : vector<1x32xf32>
    %105 = tpu.matmul %102, %104, %cst_87 {dimension_numbers = #tpu.dot_dimension_numbers<[1], [0], [0], [1], [0, 0, 1, 1], [], []>} : vector<1x16xbf16>, vector<16x32xbf16>, vector<1x32xf32> -> vector<1x32xf32>
    %106 = arith.addf %100, %105 : vector<1x32xf32>
    %107 = vector.extract_strided_slice %87 {offsets = [3, 0], sizes = [1, 16], strides = [1, 1]} : vector<9x16xf32> to vector<1x16xf32>
    %108 = arith.truncf %107 : vector<1x16xf32> to vector<1x16xbf16>
    %c3_88 = arith.constant 3 : index
    %c0_89 = arith.constant 0 : index
    %c0_90 = arith.constant 0 : index
    %109 = vector.load %arg7[%c3_88, %c0_89, %c0_90] : memref<9x16x32xbf16, #tpu.memory_space<vmem>>, vector<1x16x32xbf16>
    %110 = vector.shape_cast %109 : vector<1x16x32xbf16> to vector<16x32xbf16>
    %cst_91 = arith.constant dense<0.000000e+00> : vector<1x32xf32>
    %111 = tpu.matmul %108, %110, %cst_91 {dimension_numbers = #tpu.dot_dimension_numbers<[1], [0], [0], [1], [0, 0, 1, 1], [], []>} : vector<1x16xbf16>, vector<16x32xbf16>, vector<1x32xf32> -> vector<1x32xf32>
    %112 = arith.addf %106, %111 : vector<1x32xf32>
    %113 = vector.extract_strided_slice %87 {offsets = [4, 0], sizes = [1, 16], strides = [1, 1]} : vector<9x16xf32> to vector<1x16xf32>
    %114 = arith.truncf %113 : vector<1x16xf32> to vector<1x16xbf16>
    %c4_92 = arith.constant 4 : index
    %c0_93 = arith.constant 0 : index
    %c0_94 = arith.constant 0 : index
    %115 = vector.load %arg7[%c4_92, %c0_93, %c0_94] : memref<9x16x32xbf16, #tpu.memory_space<vmem>>, vector<1x16x32xbf16>
    %116 = vector.shape_cast %115 : vector<1x16x32xbf16> to vector<16x32xbf16>
    %cst_95 = arith.constant dense<0.000000e+00> : vector<1x32xf32>
    %117 = tpu.matmul %114, %116, %cst_95 {dimension_numbers = #tpu.dot_dimension_numbers<[1], [0], [0], [1], [0, 0, 1, 1], [], []>} : vector<1x16xbf16>, vector<16x32xbf16>, vector<1x32xf32> -> vector<1x32xf32>
    %118 = arith.addf %112, %117 : vector<1x32xf32>
    %119 = vector.extract_strided_slice %87 {offsets = [5, 0], sizes = [1, 16], strides = [1, 1]} : vector<9x16xf32> to vector<1x16xf32>
    %120 = arith.truncf %119 : vector<1x16xf32> to vector<1x16xbf16>
    %c5_96 = arith.constant 5 : index
    %c0_97 = arith.constant 0 : index
    %c0_98 = arith.constant 0 : index
    %121 = vector.load %arg7[%c5_96, %c0_97, %c0_98] : memref<9x16x32xbf16, #tpu.memory_space<vmem>>, vector<1x16x32xbf16>
    %122 = vector.shape_cast %121 : vector<1x16x32xbf16> to vector<16x32xbf16>
    %cst_99 = arith.constant dense<0.000000e+00> : vector<1x32xf32>
    %123 = tpu.matmul %120, %122, %cst_99 {dimension_numbers = #tpu.dot_dimension_numbers<[1], [0], [0], [1], [0, 0, 1, 1], [], []>} : vector<1x16xbf16>, vector<16x32xbf16>, vector<1x32xf32> -> vector<1x32xf32>
    %124 = arith.addf %118, %123 : vector<1x32xf32>
    %125 = vector.extract_strided_slice %87 {offsets = [6, 0], sizes = [1, 16], strides = [1, 1]} : vector<9x16xf32> to vector<1x16xf32>
    %126 = arith.truncf %125 : vector<1x16xf32> to vector<1x16xbf16>
    %c6_100 = arith.constant 6 : index
    %c0_101 = arith.constant 0 : index
    %c0_102 = arith.constant 0 : index
    %127 = vector.load %arg7[%c6_100, %c0_101, %c0_102] : memref<9x16x32xbf16, #tpu.memory_space<vmem>>, vector<1x16x32xbf16>
    %128 = vector.shape_cast %127 : vector<1x16x32xbf16> to vector<16x32xbf16>
    %cst_103 = arith.constant dense<0.000000e+00> : vector<1x32xf32>
    %129 = tpu.matmul %126, %128, %cst_103 {dimension_numbers = #tpu.dot_dimension_numbers<[1], [0], [0], [1], [0, 0, 1, 1], [], []>} : vector<1x16xbf16>, vector<16x32xbf16>, vector<1x32xf32> -> vector<1x32xf32>
    %130 = arith.addf %124, %129 : vector<1x32xf32>
    %131 = vector.extract_strided_slice %87 {offsets = [7, 0], sizes = [1, 16], strides = [1, 1]} : vector<9x16xf32> to vector<1x16xf32>
    %132 = arith.truncf %131 : vector<1x16xf32> to vector<1x16xbf16>
    %c7_104 = arith.constant 7 : index
    %c0_105 = arith.constant 0 : index
    %c0_106 = arith.constant 0 : index
    %133 = vector.load %arg7[%c7_104, %c0_105, %c0_106] : memref<9x16x32xbf16, #tpu.memory_space<vmem>>, vector<1x16x32xbf16>
    %134 = vector.shape_cast %133 : vector<1x16x32xbf16> to vector<16x32xbf16>
    %cst_107 = arith.constant dense<0.000000e+00> : vector<1x32xf32>
    %135 = tpu.matmul %132, %134, %cst_107 {dimension_numbers = #tpu.dot_dimension_numbers<[1], [0], [0], [1], [0, 0, 1, 1], [], []>} : vector<1x16xbf16>, vector<16x32xbf16>, vector<1x32xf32> -> vector<1x32xf32>
    %136 = arith.addf %130, %135 : vector<1x32xf32>
    %137 = vector.extract_strided_slice %87 {offsets = [8, 0], sizes = [1, 16], strides = [1, 1]} : vector<9x16xf32> to vector<1x16xf32>
    %138 = arith.truncf %137 : vector<1x16xf32> to vector<1x16xbf16>
    %c8_108 = arith.constant 8 : index
    %c0_109 = arith.constant 0 : index
    %c0_110 = arith.constant 0 : index
    %139 = vector.load %arg7[%c8_108, %c0_109, %c0_110] : memref<9x16x32xbf16, #tpu.memory_space<vmem>>, vector<1x16x32xbf16>
    %140 = vector.shape_cast %139 : vector<1x16x32xbf16> to vector<16x32xbf16>
    %cst_111 = arith.constant dense<0.000000e+00> : vector<1x32xf32>
    %141 = tpu.matmul %138, %140, %cst_111 {dimension_numbers = #tpu.dot_dimension_numbers<[1], [0], [0], [1], [0, 0, 1, 1], [], []>} : vector<1x16xbf16>, vector<16x32xbf16>, vector<1x32xf32> -> vector<1x32xf32>
    %142 = arith.addf %136, %141 : vector<1x32xf32>
    %c0_112 = arith.constant 0 : index
    %c0_113 = arith.constant 0 : index
    %143 = vector.load %arg8[%c0_112, %c0_113] : memref<1x32xf32, #tpu.memory_space<vmem>>, vector<1x32xf32>
    %144 = arith.addf %142, %143 : vector<1x32xf32>
    %cst_114 = arith.constant 0.000000e+00 : f32
    %145 = vector.broadcast %cst_114 : f32 to vector<1x32xf32>
    %146 = arith.maximumf %144, %145 : vector<1x32xf32>
    %147 = arith.truncf %146 : vector<1x32xf32> to vector<1x32xbf16>
    %c0_115 = arith.constant 0 : index
    %c0_116 = arith.constant 0 : index
    %148 = vector.load %arg9[%c0_115, %c0_116] : memref<32x6xbf16, #tpu.memory_space<vmem>>, vector<32x6xbf16>
    %cst_117 = arith.constant dense<0.000000e+00> : vector<1x6xf32>
    %149 = tpu.matmul %147, %148, %cst_117 {dimension_numbers = #tpu.dot_dimension_numbers<[1], [0], [0], [1], [0, 0, 1, 1], [], []>} : vector<1x32xbf16>, vector<32x6xbf16>, vector<1x6xf32> -> vector<1x6xf32>
    %c0_118 = arith.constant 0 : index
    %c0_119 = arith.constant 0 : index
    %150 = vector.load %arg10[%c0_118, %c0_119] : memref<1x6xf32, #tpu.memory_space<vmem>>, vector<1x6xf32>
    %151 = arith.addf %149, %150 : vector<1x6xf32>
    %c0_120 = arith.constant 0 : index
    %c0_121 = arith.constant 0 : index
    %c0_122 = arith.constant 0 : index
    %152 = vector.load %arg11[%c0_120, %c0_121, %c0_122] : memref<1x1x6xf32, #tpu.memory_space<vmem>>, vector<1x1x6xf32>
    %153 = vector.shape_cast %152 : vector<1x1x6xf32> to vector<1x6xf32>
    %154 = vector.shape_cast %151 : vector<1x6xf32> to vector<1x1x6xf32>
    tpu.vector_store %arg11[%c0_120, %c0_121, %c0_122], %154 {strides = array<i32>} : memref<1x1x6xf32, #tpu.memory_space<vmem>>, vector<1x1x6xf32>,
    return
  }
  func.func @transform_0(%arg0: i32) -> (i32, i32, i32) {
    %c0_i32 = arith.constant 0 : i32
    %c0_i32_0 = arith.constant 0 : i32
    %c0_i32_1 = arith.constant 0 : i32
    return %arg0, %c0_i32, %c0_i32_0 : i32, i32, i32
  }
  func.func @transform_1(%arg0: i32) -> (i32, i32) {
    %c0_i32 = arith.constant 0 : i32
    %c0_i32_0 = arith.constant 0 : i32
    %c0_i32_1 = arith.constant 0 : i32
    return %c0_i32, %c0_i32_0 : i32, i32
  }
  func.func @transform_2(%arg0: i32) -> (i32, i32) {
    %c0_i32 = arith.constant 0 : i32
    %c0_i32_0 = arith.constant 0 : i32
    %c0_i32_1 = arith.constant 0 : i32
    return %c0_i32, %c0_i32_0 : i32, i32
  }
  func.func @transform_3(%arg0: i32) -> (i32, i32, i32) {
    %c0_i32 = arith.constant 0 : i32
    %c0_i32_0 = arith.constant 0 : i32
    %c0_i32_1 = arith.constant 0 : i32
    %c0_i32_2 = arith.constant 0 : i32
    return %c0_i32, %c0_i32_0, %c0_i32_1 : i32, i32, i32
  }
  func.func @transform_4(%arg0: i32) -> (i32, i32, i32) {
    %c0_i32 = arith.constant 0 : i32
    %c0_i32_0 = arith.constant 0 : i32
    %c0_i32_1 = arith.constant 0 : i32
    %c0_i32_2 = arith.constant 0 : i32
    return %c0_i32, %c0_i32_0, %c0_i32_1 : i32, i32, i32
  }
  func.func @transform_5(%arg0: i32) -> (i32, i32) {
    %c0_i32 = arith.constant 0 : i32
    %c0_i32_0 = arith.constant 0 : i32
    %c0_i32_1 = arith.constant 0 : i32
    return %c0_i32, %c0_i32_0 : i32, i32
  }
  func.func @transform_6(%arg0: i32) -> (i32, i32, i32) {
    %c0_i32 = arith.constant 0 : i32
    %c0_i32_0 = arith.constant 0 : i32
    %c0_i32_1 = arith.constant 0 : i32
    %c0_i32_2 = arith.constant 0 : i32
    return %c0_i32, %c0_i32_0, %c0_i32_1 : i32, i32, i32
  }
  func.func @transform_7(%arg0: i32) -> (i32, i32) {
    %c0_i32 = arith.constant 0 : i32
    %c0_i32_0 = arith.constant 0 : i32
    %c0_i32_1 = arith.constant 0 : i32
    return %c0_i32, %c0_i32_0 : i32, i32
  }
  func.func @transform_8(%arg0: i32) -> (i32, i32) {
    %c0_i32 = arith.constant 0 : i32
    %c0_i32_0 = arith.constant 0 : i32
    %c0_i32_1 = arith.constant 0 : i32
    return %c0_i32, %c0_i32_0 : i32, i32
  }
  func.func @transform_9(%arg0: i32) -> (i32, i32) {
    %c0_i32 = arith.constant 0 : i32
    %c0_i32_0 = arith.constant 0 : i32
    %c0_i32_1 = arith.constant 0 : i32
    return %c0_i32, %c0_i32_0 : i32, i32
  }
  func.func @transform_10(%arg0: i32) -> (i32, i32, i32) {
    %c0_i32 = arith.constant 0 : i32
    %c0_i32_0 = arith.constant 0 : i32
    %c0_i32_1 = arith.constant 0 : i32
    return %arg0, %c0_i32, %c0_i32_0 : i32, i32, i32
  }
}

</mosaic_0001>

<llo_original>
// kernel: a_call__.1
$region0: #{a_call__.1}
  #allocation0 [shape = 'u32[]', space=smem, size = 0x4, offset = 0x4, fixed_abs, tag = 'smem constant byte address 0x4 - core index']
  #allocation1 [shape = 'u32[72,128]{1,0:T(1,128)}', space=vmem, size = 0x9000, scoped, tag = 'internal scratch']
  %s0 = inlined_call_operand.vmem [shape: bf16[2,49,144], index: 0, kind: input, shape index: {}]
  %s1 = inlined_call_operand.vmem [shape: bf16[144,8], index: 1, kind: input, shape index: {}]
  %s2 = inlined_call_operand.vmem [shape: f32[1,8], index: 2, kind: input, shape index: {}]
  %s3 = inlined_call_operand.vmem [shape: bf16[9,9,49], index: 3, kind: input, shape index: {}]
  %s4 = inlined_call_operand.vmem [shape: bf16[9,8,16], index: 4, kind: input, shape index: {}]
  %s5 = inlined_call_operand.vmem [shape: f32[1,16], index: 5, kind: input, shape index: {}]
  %s6 = inlined_call_operand.vmem [shape: bf16[9,16,32], index: 6, kind: input, shape index: {}]
  %s7 = inlined_call_operand.vmem [shape: f32[1,32], index: 7, kind: input, shape index: {}]
  %s8 = inlined_call_operand.vmem [shape: bf16[32,6], index: 8, kind: input, shape index: {}]
  %s9 = inlined_call_operand.vmem [shape: f32[1,6], index: 9, kind: input, shape index: {}]
  %s10 = inlined_call_operand.hbm [shape: f32[2,1,6], index: 10, kind: output, shape index: {}]
  %s11 = sld [smem:[#allocation0]]
  $region73: #{a_call__.1} parent=0
    _
  %s13 = ssub.s32 1, %s11
  %s14 = scalar_select 0, %s13, %s11
  $region1: #{a_call__.1} parent=0
    #allocation2 [shape = 'u8[1024]{0}', space=vmem, size = 0x400, scoped, tag = 'output window, operand 0']
    #allocation3 [shape = 's32[2]{0}', space=sflag, size = 0x8, scoped, tag = 'scoped memory for a_call__.1']
    %15 = vsyncpa [#allocation3], 0
    %s16 = scalar_lea.sflag [#allocation3], 1
    %17 = vsyncpa %s16, 0
    loop: start=0, step=1, limit=4
    $region2: #{a_call__.1} parent=1 // loop_pre_header
      _
    $region3: #{a_call__.1} parent=1 // loop_header
      %s19 = sphi 0, %s23
      %p20 = scmp.ge.s32.totalorder %s19, 4
      %s29 = sphi 0, %s31
      %s32 = sphi 0, %s29
      %s33 = sphi 0, %s32
      %s49 = sphi 0, %s33
      %s53 = sphi 0, %s53
      %s55 = sphi 0, %s53
      %s56 = sphi 0, %s55
      %s70 = sphi 0, %s56
      %s74 = sphi 0, %s74
      %s76 = sphi 0, %s74
      %s77 = sphi 0, %s76
      %s91 = sphi 0, %s77
      %s95 = sphi 0, %s95
      %s97 = sphi 0, %s95
      %s98 = sphi 0, %s97
      %s112 = sphi 0, %s98
      %s116 = sphi 0, %s116
      %s118 = sphi 0, %s116
      %s119 = sphi 0, %s118
      %s133 = sphi 0, %s119
      %s137 = sphi 0, %s137
      %s139 = sphi 0, %s137
      %s140 = sphi 0, %s139
      %s154 = sphi 0, %s140
      %s158 = sphi 0, %s158
      %s160 = sphi 0, %s158
      %s161 = sphi 0, %s160
      %s175 = sphi 0, %s161
      %s179 = sphi 0, %s179
      %s181 = sphi 0, %s179
      %s182 = sphi 0, %s181
      %s196 = sphi 0, %s182
      %s200 = sphi 0, %s200
      %s202 = sphi 0, %s200
      %s203 = sphi 0, %s202
      %s217 = sphi 0, %s203
      %s221 = sphi 0, %s221
      %s223 = sphi 0, %s221
      %s224 = sphi 0, %s223
      %s238 = sphi 0, %s224
      %s244 = sphi 0, %s246
      %s247 = sphi 0, %s244
      %s248 = sphi 0, %s247
      %s264 = sphi 0, %s248
    $region4: #{a_call__.1} parent=1 // loop_header_branch
      %22 = sbr.rel (%p20) target = $region8
    $region5: #{a_call__.1} parent=1 // loop_body
      %s24 = ssub.s32 %s19, 1
      %s25 = ssub.s32 %s19, 2
      %s26 = sadd.s32 %s19, 1
      %s27 = ssub.s32 %s19, %s26
      %p28 = scmp.eq.s32.totalorder %s27, 0
      %s30 = sadd.s32 %s29, 1
      %s31 = scalar_select %p28, %s29, %s30
      %p34 = pneg %p28
      %p35 = scmp.eq.s32.totalorder %s19, 1
      %p36 = por %p34, %p35
      %p37 = scmp.ne.s32.totalorder %s29, %s32
      %p38 = scmp.eq.s32.totalorder %s19, 0
      %p39 = por %p37, %p38
      %p40 = scmp.ne.s32.totalorder %s29, %s32
      %p41 = scmp.eq.s32.totalorder %s24, 1
      %p42 = por %p40, %p41
      %p43 = scmp.ne.s32.totalorder %s32, %s33
      %p44 = scmp.eq.s32.totalorder %s24, 0
      %p45 = por %p43, %p44
      %p46 = scmp.ne.s32.totalorder %s32, %s33
      %p47 = scmp.eq.s32.totalorder %s25, 1
      %p48 = por %p46, %p47
      %p50 = scmp.ne.s32.totalorder %s33, %s49
      %p51 = scmp.eq.s32.totalorder %s25, 0
      %p52 = por %p50, %p51
      %s54 = sadd.s32 %s53, 1
      %p57 = scmp.eq.s32.totalorder %s19, 1
      %p58 = scmp.ne.s32.totalorder %s53, %s55
      %p59 = scmp.eq.s32.totalorder %s19, 0
      %p60 = por %p58, %p59
      %p61 = scmp.ne.s32.totalorder %s53, %s55
      %p62 = scmp.eq.s32.totalorder %s24, 1
      %p63 = por %p61, %p62
      %p64 = scmp.ne.s32.totalorder %s55, %s56
      %p65 = scmp.eq.s32.totalorder %s24, 0
      %p66 = por %p64, %p65
      %p67 = scmp.ne.s32.totalorder %s55, %s56
      %p68 = scmp.eq.s32.totalorder %s25, 1
      %p69 = por %p67, %p68
      %p71 = scmp.ne.s32.totalorder %s56, %s70
      %p72 = scmp.eq.s32.totalorder %s25, 0
      %p73 = por %p71, %p72
      %s75 = sadd.s32 %s74, 1
      %p78 = scmp.eq.s32.totalorder %s19, 1
      %p79 = scmp.ne.s32.totalorder %s74, %s76
      %p80 = scmp.eq.s32.totalorder %s19, 0
      %p81 = por %p79, %p80
      %p82 = scmp.ne.s32.totalorder %s74, %s76
      %p83 = scmp.eq.s32.totalorder %s24, 1
      %p84 = por %p82, %p83
      %p85 = scmp.ne.s32.totalorder %s76, %s77
      %p86 = scmp.eq.s32.totalorder %s24, 0
      %p87 = por %p85, %p86
      %p88 = scmp.ne.s32.totalorder %s76, %s77
      %p89 = scmp.eq.s32.totalorder %s25, 1
      %p90 = por %p88, %p89
      %p92 = scmp.ne.s32.totalorder %s77, %s91
      %p93 = scmp.eq.s32.totalorder %s25, 0
      %p94 = por %p92, %p93
      %s96 = sadd.s32 %s95, 1
      %p99 = scmp.eq.s32.totalorder %s19, 1
      %p100 = scmp.ne.s32.totalorder %s95, %s97
      %p101 = scmp.eq.s32.totalorder %s19, 0
      %p102 = por %p100, %p101
      %p103 = scmp.ne.s32.totalorder %s95, %s97
      %p104 = scmp.eq.s32.totalorder %s24, 1
      %p105 = por %p103, %p104
      %p106 = scmp.ne.s32.totalorder %s97, %s98
      %p107 = scmp.eq.s32.totalorder %s24, 0
      %p108 = por %p106, %p107
      %p109 = scmp.ne.s32.totalorder %s97, %s98
      %p110 = scmp.eq.s32.totalorder %s25, 1
      %p111 = por %p109, %p110
      %p113 = scmp.ne.s32.totalorder %s98, %s112
      %p114 = scmp.eq.s32.totalorder %s25, 0
      %p115 = por %p113, %p114
      %s117 = sadd.s32 %s116, 1
      %p120 = scmp.eq.s32.totalorder %s19, 1
      %p121 = scmp.ne.s32.totalorder %s116, %s118
      %p122 = scmp.eq.s32.totalorder %s19, 0
      %p123 = por %p121, %p122
      %p124 = scmp.ne.s32.totalorder %s116, %s118
      %p125 = scmp.eq.s32.totalorder %s24, 1
      %p126 = por %p124, %p125
      %p127 = scmp.ne.s32.totalorder %s118, %s119
      %p128 = scmp.eq.s32.totalorder %s24, 0
      %p129 = por %p127, %p128
      %p130 = scmp.ne.s32.totalorder %s118, %s119
      %p131 = scmp.eq.s32.totalorder %s25, 1
      %p132 = por %p130, %p131
      %p134 = scmp.ne.s32.totalorder %s119, %s133
      %p135 = scmp.eq.s32.totalorder %s25, 0
      %p136 = por %p134, %p135
      %s138 = sadd.s32 %s137, 1
      %p141 = scmp.eq.s32.totalorder %s19, 1
      %p142 = scmp.ne.s32.totalorder %s137, %s139
      %p143 = scmp.eq.s32.totalorder %s19, 0
      %p144 = por %p142, %p143
      %p145 = scmp.ne.s32.totalorder %s137, %s139
      %p146 = scmp.eq.s32.totalorder %s24, 1
      %p147 = por %p145, %p146
      %p148 = scmp.ne.s32.totalorder %s139, %s140
      %p149 = scmp.eq.s32.totalorder %s24, 0
      %p150 = por %p148, %p149
      %p151 = scmp.ne.s32.totalorder %s139, %s140
      %p152 = scmp.eq.s32.totalorder %s25, 1
      %p153 = por %p151, %p152
      %p155 = scmp.ne.s32.totalorder %s140, %s154
      %p156 = scmp.eq.s32.totalorder %s25, 0
      %p157 = por %p155, %p156
      %s159 = sadd.s32 %s158, 1
      %p162 = scmp.eq.s32.totalorder %s19, 1
      %p163 = scmp.ne.s32.totalorder %s158, %s160
      %p164 = scmp.eq.s32.totalorder %s19, 0
      %p165 = por %p163, %p164
      %p166 = scmp.ne.s32.totalorder %s158, %s160
      %p167 = scmp.eq.s32.totalorder %s24, 1
      %p168 = por %p166, %p167
      %p169 = scmp.ne.s32.totalorder %s160, %s161
      %p170 = scmp.eq.s32.totalorder %s24, 0
      %p171 = por %p169, %p170
      %p172 = scmp.ne.s32.totalorder %s160, %s161
      %p173 = scmp.eq.s32.totalorder %s25, 1
      %p174 = por %p172, %p173
      %p176 = scmp.ne.s32.totalorder %s161, %s175
      %p177 = scmp.eq.s32.totalorder %s25, 0
      %p178 = por %p176, %p177
      %s180 = sadd.s32 %s179, 1
      %p183 = scmp.eq.s32.totalorder %s19, 1
      %p184 = scmp.ne.s32.totalorder %s179, %s181
      %p185 = scmp.eq.s32.totalorder %s19, 0
      %p186 = por %p184, %p185
      %p187 = scmp.ne.s32.totalorder %s179, %s181
      %p188 = scmp.eq.s32.totalorder %s24, 1
      %p189 = por %p187, %p188
      %p190 = scmp.ne.s32.totalorder %s181, %s182
      %p191 = scmp.eq.s32.totalorder %s24, 0
      %p192 = por %p190, %p191
      %p193 = scmp.ne.s32.totalorder %s181, %s182
      %p194 = scmp.eq.s32.totalorder %s25, 1
      %p195 = por %p193, %p194
      %p197 = scmp.ne.s32.totalorder %s182, %s196
      %p198 = scmp.eq.s32.totalorder %s25, 0
      %p199 = por %p197, %p198
      %s201 = sadd.s32 %s200, 1
      %p204 = scmp.eq.s32.totalorder %s19, 1
      %p205 = scmp.ne.s32.totalorder %s200, %s202
      %p206 = scmp.eq.s32.totalorder %s19, 0
      %p207 = por %p205, %p206
      %p208 = scmp.ne.s32.totalorder %s200, %s202
      %p209 = scmp.eq.s32.totalorder %s24, 1
      %p210 = por %p208, %p209
      %p211 = scmp.ne.s32.totalorder %s202, %s203
      %p212 = scmp.eq.s32.totalorder %s24, 0
      %p213 = por %p211, %p212
      %p214 = scmp.ne.s32.totalorder %s202, %s203
      %p215 = scmp.eq.s32.totalorder %s25, 1
      %p216 = por %p214, %p215
      %p218 = scmp.ne.s32.totalorder %s203, %s217
      %p219 = scmp.eq.s32.totalorder %s25, 0
      %p220 = por %p218, %p219
      %s222 = sadd.s32 %s221, 1
      %p225 = scmp.eq.s32.totalorder %s19, 1
      %p226 = scmp.ne.s32.totalorder %s221, %s223
      %p227 = scmp.eq.s32.totalorder %s19, 0
      %p228 = por %p226, %p227
      %p229 = scmp.ne.s32.totalorder %s221, %s223
      %p230 = scmp.eq.s32.totalorder %s24, 1
      %p231 = por %p229, %p230
      %p232 = scmp.ne.s32.totalorder %s223, %s224
      %p233 = scmp.eq.s32.totalorder %s24, 0
      %p234 = por %p232, %p233
      %p235 = scmp.ne.s32.totalorder %s223, %s224
      %p236 = scmp.eq.s32.totalorder %s25, 1
      %p237 = por %p235, %p236
      %p239 = scmp.ne.s32.totalorder %s224, %s238
      %p240 = scmp.eq.s32.totalorder %s25, 0
      %p241 = por %p239, %p240
      %s242 = ssub.s32 %s19, %s26
      %p243 = scmp.eq.s32.totalorder %s242, 0
      %s245 = sadd.s32 %s244, 1
      %s246 = scalar_select %p243, %s244, %s245
      %p249 = pneg %p243
      %p250 = scmp.eq.s32.totalorder %s19, 1
      %p251 = por %p249, %p250
      %p252 = scmp.ne.s32.totalorder %s244, %s247
      %p253 = scmp.eq.s32.totalorder %s19, 0
      %p254 = por %p252, %p253
      %p255 = scmp.ne.s32.totalorder %s244, %s247
      %p256 = scmp.eq.s32.totalorder %s24, 1
      %p257 = por %p255, %p256
      %p258 = scmp.ne.s32.totalorder %s247, %s248
      %p259 = scmp.eq.s32.totalorder %s24, 0
      %p260 = por %p258, %p259
      %p261 = scmp.ne.s32.totalorder %s247, %s248
      %p262 = scmp.eq.s32.totalorder %s25, 1
      %p263 = por %p261, %p262
      %p265 = scmp.ne.s32.totalorder %s248, %s264
      %p266 = scmp.eq.s32.totalorder %s25, 0
      %p267 = por %p265, %p266
      %p268 = scmp.le.s32.totalorder 1, %s19
      %p269 = scmp.lt.s32.totalorder %s19, 3
      %p270 = pnand %p268, %p269
      %p271 = pneg %p270
      // Predicated region
      $region9: #{a_call__.1} parent=5 // pred_check
        _
      $region10: #{a_call__.1} parent=5 // pred_check_branch
        %273 = sbr.rel (%p270) target = $region12
      $region11: #{a_call__.1} parent=5 // pred_region
        %s274 = ssub.s32 %s19, 1
        // Predicated region
        $region13: #{a_call__.1} parent=11 // pred_check
          %p275 = pneg %p66
        $region14: #{a_call__.1} parent=11 // pred_check_branch
          %277 = sbr.rel (%p275) target = $region16
        $region15: #{a_call__.1} parent=11 // pred_region
          _
        $region16: #{a_call__.1} parent=11 // pred_fallthru
          _
        // Predicated region
        $region17: #{a_call__.1} parent=11 // pred_check
          %p278 = pneg %p87
        $region18: #{a_call__.1} parent=11 // pred_check_branch
          %280 = sbr.rel (%p278) target = $region20
        $region19: #{a_call__.1} parent=11 // pred_region
          _
        $region20: #{a_call__.1} parent=11 // pred_fallthru
          _
        // Predicated region
        $region21: #{a_call__.1} parent=11 // pred_check
          %p281 = pneg %p108
        $region22: #{a_call__.1} parent=11 // pred_check_branch
          %283 = sbr.rel (%p281) target = $region24
        $region23: #{a_call__.1} parent=11 // pred_region
          _
        $region24: #{a_call__.1} parent=11 // pred_fallthru
          _
        // Predicated region
        $region25: #{a_call__.1} parent=11 // pred_check
          %p284 = pneg %p129
        $region26: #{a_call__.1} parent=11 // pred_check_branch
          %286 = sbr.rel (%p284) target = $region28
        $region27: #{a_call__.1} parent=11 // pred_region
          _
        $region28: #{a_call__.1} parent=11 // pred_fallthru
          _
        // Predicated region
        $region29: #{a_call__.1} parent=11 // pred_check
          %p287 = pneg %p150
        $region30: #{a_call__.1} parent=11 // pred_check_branch
          %289 = sbr.rel (%p287) target = $region32
        $region31: #{a_call__.1} parent=11 // pred_region
          _
        $region32: #{a_call__.1} parent=11 // pred_fallthru
          _
        // Predicated region
        $region33: #{a_call__.1} parent=11 // pred_check
          %p290 = pneg %p171
        $region34: #{a_call__.1} parent=11 // pred_check_branch
          %292 = sbr.rel (%p290) target = $region36
        $region35: #{a_call__.1} parent=11 // pred_region
          _
        $region36: #{a_call__.1} parent=11 // pred_fallthru
          _
        // Predicated region
        $region37: #{a_call__.1} parent=11 // pred_check
          %p293 = pneg %p192
        $region38: #{a_call__.1} parent=11 // pred_check_branch
          %295 = sbr.rel (%p293) target = $region40
        $region39: #{a_call__.1} parent=11 // pred_region
          _
        $region40: #{a_call__.1} parent=11 // pred_fallthru
          _
        // Predicated region
        $region41: #{a_call__.1} parent=11 // pred_check
          %p296 = pneg %p213
        $region42: #{a_call__.1} parent=11 // pred_check_branch
          %298 = sbr.rel (%p296) target = $region44
        $region43: #{a_call__.1} parent=11 // pred_region
          _
        $region44: #{a_call__.1} parent=11 // pred_fallthru
          _
        // Predicated region
        $region45: #{a_call__.1} parent=11 // pred_check
          %p299 = pneg %p234
        $region46: #{a_call__.1} parent=11 // pred_check_branch
          %301 = sbr.rel (%p299) target = $region48
        $region47: #{a_call__.1} parent=11 // pred_region
          _
        $region48: #{a_call__.1} parent=11 // pred_fallthru
          _
      $region12: #{a_call__.1} parent=5 // pred_fallthru
        _
      %p302 = scmp.lt.s32.totalorder %s19, 2
      // Predicated region
      $region49: #{a_call__.1} parent=5 // pred_check
        %p303 = pneg %p302
      $region50: #{a_call__.1} parent=5 // pred_check_branch
        %305 = sbr.rel (%p303) target = $region52
      $region51: #{a_call__.1} parent=5 // pred_region
        // Predicated region
        $region53: #{a_call__.1} parent=51 // pred_check
          %p306 = pneg %p39
        $region54: #{a_call__.1} parent=51 // pred_check_branch
          %308 = sbr.rel (%p306) target = $region56
        $region55: #{a_call__.1} parent=51 // pred_region
          %p309 = scmp.lt.s32.totalorder %s19, 1
          %s310 = scalar_select %p309, %s19, 1
          %s311 = smul.addr %s310, 14
          %s312 = smul.addr %s311, 4
          %s313 = scalar_lea.vmem %s0, %s312
        $region56: #{a_call__.1} parent=51 // pred_fallthru
          _
      $region52: #{a_call__.1} parent=5 // pred_fallthru
        _
      %p314 = scmp.le.s32.totalorder 1, %s19
      %p315 = scmp.lt.s32.totalorder %s19, 3
      %p316 = pnand %p314, %p315
      %p317 = pneg %p316
      // Predicated region
      $region57: #{a_call__.1} parent=5 // pred_check
        _
      $region58: #{a_call__.1} parent=5 // pred_check_branch
        %319 = sbr.rel (%p316) target = $region60
      $region59: #{a_call__.1} parent=5 // pred_region
        %s320 = ssub.s32 %s19, 1
        %p321 = scmp.lt.s32.totalorder %s24, 1
        %s322 = scalar_select %p321, %s24, 1
        %s323 = smul.addr %s322, 14
        %s324 = smul.addr %s323, 4
        %s325 = scalar_lea.vmem %s0, %s324
        %p326 = pneg %p45
        %p327 = pneg %p42
        %p328 = pneg %p66
        %p329 = pneg %p63
        %p330 = pneg %p87
        %p331 = pneg %p84
        %p332 = pneg %p108
        %p333 = pneg %p105
        %p334 = pneg %p129
        %p335 = pneg %p126
        %p336 = pneg %p150
        %p337 = pneg %p147
        %p338 = pneg %p171
        %p339 = pneg %p168
        %p340 = pneg %p192
        %p341 = pneg %p189
        %p342 = pneg %p213
        %p343 = pneg %p210
        %p344 = pneg %p234
        %p345 = pneg %p231
        %p346 = pneg %p260
        %p347 = pneg %p257
        %s348 = sand.u32 %s247, 1
        %s349 = scalar_lea.sflag [#allocation3], %s348
        %s350 = sand.u32 %s247, 1
        %s351 = scalar_lea.vmem [#allocation2], %s350
        %p352 = scmp.lt.s32.totalorder %s24, 1
        %s353 = scalar_select %p352, %s24, 1
        %s354 = smul.addr %s353, 14
        %s355 = smul.addr %s354, 4
        %s356 = scalar_lea.vmem %s0, %s355
        %v358 = vld [vmem:[%s356] sm:$0xff]
        %v359 = vld [vmem:[%s356 + $0x8] sm:$0xff]
        %v360 = vld [vmem:[%s356 + $0x10] sm:$0xff]
        %v361 = vld [vmem:[%s356 + $0x18] sm:$0xff]
        %v362 = vld [vmem:[%s356 + $0x20] sm:$0xff]
        %v363 = vld [vmem:[%s356 + $0x28] sm:$0xff]
        %v364 = vld [vmem:[%s356 + $0x30] sm:$0x11]
        %v365 = vld [vmem:[%s1] sm:$0xf]
        %v366 = vld [vmem:[%s1 + $0x4] sm:$0xf]
        %v367 = vld [vmem:[%s1 + $0x8] sm:$0xf]
        %v368 = vld [vmem:[%s1 + $0xc] sm:$0xf]
        %v369 = vld [vmem:[%s1 + $0x10] sm:$0xf]
        %v370 = vld [vmem:[%s1 + $0x14] sm:$0xf]
        %v371 = vld [vmem:[%s1 + $0x18] sm:$0xf]
        %v372 = vld [vmem:[%s1 + $0x1c] sm:$0xf]
        %v373 = vld [vmem:[%s1 + $0x20] sm:$0xf]
        %v374 = vld [vmem:[%s1 + $0x24] sm:$0xf]
        %v375 = vld [vmem:[%s1 + $0x28] sm:$0xf]
        %v376 = vld [vmem:[%s1 + $0x2c] sm:$0xf]
        %v377 = vld [vmem:[%s1 + $0x30] sm:$0xf]
        %v378 = vld [vmem:[%s1 + $0x34] sm:$0xf]
        %v379 = vld [vmem:[%s1 + $0x38] sm:$0xf]
        %v380 = vld [vmem:[%s1 + $0x3c] sm:$0xf]
        %v381 = vld [vmem:[%s1 + $0x40] sm:$0xf]
        %v382 = vld [vmem:[%s1 + $0x44] sm:$0xf]
        %v383 = vld [vmem:[%s2] sm:$0x1]
        %v385 = vperm.slane %v383, 0
        %v394 = vunpack.c.l.b16 %v358
        %v395 = vunpack.c.h.b16 %v358
        %v396 = vunpack.c.l.b16 %v359
        %v397 = vunpack.c.h.b16 %v359
        %v398 = vunpack.c.l.b16 %v360
        %v399 = vunpack.c.h.b16 %v360
        %v400 = vunpack.c.l.b16 %v361
        %v401 = vunpack.c.h.b16 %v361
        %v402 = vunpack.c.l.b16 %v362
        %v403 = vunpack.c.h.b16 %v362
        %v404 = vunpack.c.l.b16 %v363
        %v405 = vunpack.c.h.b16 %v363
        %v406 = vunpack.c.l.b16 %v364
        %v407 = vunpack.c.h.b16 %v364
        %v408 = vpack.c.b16 %v396, %v394
        %v409 = vpack.c.b16 %v397, %v395
        %v410 = vpack.c.b16 %v400, %v398
        %v411 = vpack.c.b16 %v401, %v399
        %v412 = vpack.c.b16 %v404, %v402
        %v413 = vpack.c.b16 %v405, %v403
        %v414 = vpack.c.b16 %v406, %v406
        %v415 = vpack.c.b16 %v407, %v407
        %v438 = vunpack.c.l.b16 %v365
        %v439 = vunpack.c.l.b16 %v366
        %v440 = vunpack.c.l.b16 %v367
        %v441 = vunpack.c.l.b16 %v368
        %v442 = vunpack.c.l.b16 %v369
        %v443 = vunpack.c.l.b16 %v370
        %v444 = vunpack.c.l.b16 %v371
        %v445 = vunpack.c.l.b16 %v372
        %v446 = vunpack.c.l.b16 %v373
        %v447 = vunpack.c.l.b16 %v374
        %v448 = vunpack.c.l.b16 %v375
        %v449 = vunpack.c.l.b16 %v376
        %v450 = vunpack.c.l.b16 %v377
        %v451 = vunpack.c.l.b16 %v378
        %v452 = vunpack.c.l.b16 %v379
        %v453 = vunpack.c.l.b16 %v380
        %v454 = vunpack.c.l.b16 %v381
        %v455 = vunpack.c.l.b16 %v382
        %v456 = vpack.c.b16 %v439, %v438
        %v457 = vpack.c.b16 %v441, %v440
        %v458 = vpack.c.b16 %v443, %v442
        %v459 = vpack.c.b16 %v445, %v444
        %v460 = vpack.c.b16 %v447, %v446
        %v461 = vpack.c.b16 %v449, %v448
        %v462 = vpack.c.b16 %v451, %v450
        %v463 = vpack.c.b16 %v453, %v452
        %v464 = vpack.c.b16 %v455, %v454
        %vm474 = vcmask 130048
        %v476 = vsel %vm474, %v409, 0
        %v479 = vsel %vm474, %v411, 0
        %v482 = vsel %vm474, %v413, 0
        %v485 = vsel %vm474, %v415, 0
        %487 = vmatpush.bf16.msra.mxu0 %v463
        %488 = vmatpush.bf16.msra.mxu0 %v462
        %489 = vmatpush.bf16.msra.mxu0 %v461
        %490 = vmatpush.bf16.msra.mxu0 %v460
        %491 = vmatpush.bf16.msra.mxu0 %v459
        %492 = vmatpush.bf16.msra.mxu0 %v458
        %493 = vmatpush.bf16.msra.mxu0 %v457
        %494 = vmatpush.bf16.msra.mxu0 %v456
        %495 = vmatmul.bf16.gmra.mxu0 %v408
        %v496 = vpop.f32.mrf.mxu0
        %v497 = vadd.f32 %v385, %v496
        %v498 = vpop.f32.mrf.mxu0
        %v499 = vadd.f32 %v385, %v498
        %500 = vmatmul.bf16.gmra.mxu0 %v410
        %v501 = vpop.f32.mrf.mxu0
        %v502 = vadd.f32 %v385, %v501
        %v503 = vpop.f32.mrf.mxu0
        %v504 = vadd.f32 %v385, %v503
        %505 = vmatmul.bf16.gmra.mxu0 %v412
        %v506 = vpop.f32.mrf.mxu0
        %v507 = vadd.f32 %v385, %v506
        %v508 = vpop.f32.mrf.mxu0
        %v509 = vadd.f32 %v385, %v508
        %510 = vmatmul.bf16.gmra.mxu0 %v414
        %v511 = vpop.f32.mrf.mxu0
        %v512 = vadd.f32 %v385, %v511
        %v513 = vpop.f32.mrf.mxu0
        %514 = vdwg.mxu0
        %515 = vmatpush.bf16.msra.mxu0 0
        %516 = vmatpush.bf16.msra.mxu0 0
        %517 = vmatpush.bf16.msra.mxu0 0
        %518 = vmatpush.bf16.msra.mxu0 0
        %519 = vmatpush.bf16.msra.mxu0 0
        %520 = vmatpush.bf16.msra.mxu0 0
        %521 = vmatpush.bf16.msra.mxu0 0
        %522 = vmatpush.bf16.msra.mxu0 %v464
        %523 = vmatmul.bf16.gmra.mxu0 %v476
        %v524 = vpop.f32.mrf.mxu0
        %v525 = vadd.f32 %v497, %v524
        %v526 = vpop.f32.mrf.mxu0
        %v527 = vadd.f32 %v499, %v526
        %528 = vmatmul.bf16.gmra.mxu0 %v479
        %v529 = vpop.f32.mrf.mxu0
        %v530 = vadd.f32 %v502, %v529
        %v531 = vpop.f32.mrf.mxu0
        %v532 = vadd.f32 %v504, %v531
        %533 = vmatmul.bf16.gmra.mxu0 %v482
        %v534 = vpop.f32.mrf.mxu0
        %v535 = vadd.f32 %v507, %v534
        %v536 = vpop.f32.mrf.mxu0
        %v537 = vadd.f32 %v509, %v536
        %538 = vmatmul.bf16.gmra.mxu0 %v485
        %v539 = vpop.f32.mrf.mxu0
        %v540 = vadd.f32 %v512, %v539
        %v541 = vpop.f32.mrf.mxu0
        %542 = vdwg.mxu0
        %v543 = vmax.f32 %v525, 0.0
        %v544 = vmax.f32 %v527, 0.0
        %v545 = vmax.f32 %v530, 0.0
        %v546 = vmax.f32 %v532, 0.0
        %v547 = vmax.f32 %v535, 0.0
        %v548 = vmax.f32 %v537, 0.0
        %v549 = vmax.f32 %v540, 0.0
        %v550 = vpack.c.bf16 %v544, %v543
        %v551 = vpack.c.bf16 %v546, %v545
        %v552 = vpack.c.bf16 %v548, %v547
        %v553 = vpack.c.bf16 %v549, %v549
        %v554 = vld [vmem:[%s3] sm:$0xf]
        %v555 = vld [vmem:[%s3 + $0x4] sm:$0x1]
        %v558 = vunpack.c.l.b16 %v554
        %v559 = vunpack.c.l.b16 %v555
        %v560 = vpack.c.b16 %v559, %v558
        %vm561 = vcmask 400384
        %v563 = vsel %vm561, %v560, 0
        %vm565 = vcmask 1040384
        %v566 = vsel 0, 4294967295, 65535
        %v567 = vsel %vm565, %v566, 0
        %v569 = vand.u32 %v553, %v567
        %571 = vmatpush.bf16.msra.mxu0 0
        %572 = vmatpush.bf16.msra.mxu0 0
        %573 = vmatpush.bf16.msra.mxu0 0
        %574 = vmatpush.bf16.msra.mxu0 0
        %575 = vmatpush.bf16.msra.mxu0 %v569
        %576 = vmatpush.bf16.msra.mxu0 %v552
        %577 = vmatpush.bf16.msra.mxu0 %v551
        %578 = vmatpush.bf16.msra.mxu0 %v550
        %579 = vmatmul.bf16.gmra.mxu0 %v563
        %v580 = vpop.f32.mrf.mxu0
        %v581 = vadd.f32 0.0, %v580
        %v582 = vpop.f32.mrf.mxu0
        %v583 = vadd.f32 0.0, %v582
        %584 = vdwg.mxu0
        %v585 = vpack.c.bf16 %v583, %v581
        %v586 = vld [vmem:[%s4] sm:$0xf]
        %s587 = scalar_lea.vmem %s3, 8
        %v588 = vld [vmem:[%s587] sm:$0xf]
        %v589 = vld [vmem:[%s587 + $0x4] sm:$0x1]
        %v592 = vunpack.c.l.b16 %v588
        %v593 = vunpack.c.l.b16 %v589
        %v594 = vpack.c.b16 %v593, %v592
        %v596 = vsel %vm561, %v594, 0
        %598 = vmatpush.bf16.msra.mxu0 0
        %599 = vmatpush.bf16.msra.mxu0 0
        %600 = vmatpush.bf16.msra.mxu0 0
        %601 = vmatpush.bf16.msra.mxu0 0
        %602 = vmatpush.bf16.msra.mxu0 %v569
        %603 = vmatpush.bf16.msra.mxu0 %v552
        %604 = vmatpush.bf16.msra.mxu0 %v551
        %605 = vmatpush.bf16.msra.mxu0 %v550
        %606 = vmatmul.bf16.gmra.mxu0 %v596
        %v607 = vpop.f32.mrf.mxu0
        %v608 = vadd.f32 0.0, %v607
        %v609 = vpop.f32.mrf.mxu0
        %v610 = vadd.f32 0.0, %v609
        %611 = vdwg.mxu0
        %v612 = vpack.c.bf16 %v610, %v608
        %s613 = scalar_lea.vmem %s4, 4
        %v614 = vld [vmem:[%s613] sm:$0xf]
        %vm615 = vcmask 64512
        %v617 = vsel %vm615, %v612, 0
        %vm619 = vcmask 1043456
        %v621 = vsel %vm619, %v614, 0
        %623 = vmatpush.bf16.msra.mxu0 0
        %624 = vmatpush.bf16.msra.mxu0 0
        %625 = vmatpush.bf16.msra.mxu0 0
        %626 = vmatpush.bf16.msra.mxu0 0
        %627 = vmatpush.bf16.msra.mxu0 0
        %628 = vmatpush.bf16.msra.mxu0 0
        %629 = vmatpush.bf16.msra.mxu0 0
        %630 = vmatpush.bf16.msra.mxu0 %v621
        %631 = vmatmul.bf16.gmra.mxu0 %v617
        %v632 = vpop.f32.mrf.mxu0
        %v633 = vadd.f32 0.0, %v632
        %v634 = vpop.f32.mrf.mxu0
        %v635 = vadd.f32 0.0, %v634
        %636 = vdwg.mxu0
        %v638 = vsel %vm615, %v585, 0
        %v641 = vsel %vm619, %v586, 0
        %643 = vmatpush.bf16.msra.mxu0 0
        %644 = vmatpush.bf16.msra.mxu0 0
        %645 = vmatpush.bf16.msra.mxu0 0
        %646 = vmatpush.bf16.msra.mxu0 0
        %647 = vmatpush.bf16.msra.mxu0 0
        %648 = vmatpush.bf16.msra.mxu0 0
        %649 = vmatpush.bf16.msra.mxu0 0
        %650 = vmatpush.bf16.msra.mxu0 %v641
        %651 = vmatmul.bf16.gmra.mxu0 %v638
        %v652 = vpop.f32.mrf.mxu0
        %v653 = vadd.f32 %v633, %v652
        %v654 = vpop.f32.mrf.mxu0
        %v655 = vadd.f32 %v635, %v654
        %656 = vdwg.mxu0
        %s657 = scalar_lea.vmem %s3, 16
        %v658 = vld [vmem:[%s657] sm:$0xf]
        %v659 = vld [vmem:[%s657 + $0x4] sm:$0x1]
        %v662 = vunpack.c.l.b16 %v658
        %v663 = vunpack.c.l.b16 %v659
        %v664 = vpack.c.b16 %v663, %v662
        %v666 = vsel %vm561, %v664, 0
        %668 = vmatpush.bf16.msra.mxu0 0
        %669 = vmatpush.bf16.msra.mxu0 0
        %670 = vmatpush.bf16.msra.mxu0 0
        %671 = vmatpush.bf16.msra.mxu0 0
        %672 = vmatpush.bf16.msra.mxu0 %v569
        %673 = vmatpush.bf16.msra.mxu0 %v552
        %674 = vmatpush.bf16.msra.mxu0 %v551
        %675 = vmatpush.bf16.msra.mxu0 %v550
        %676 = vmatmul.bf16.gmra.mxu0 %v666
        %v677 = vpop.f32.mrf.mxu0
        %v678 = vadd.f32 0.0, %v677
        %v679 = vpop.f32.mrf.mxu0
        %v680 = vadd.f32 0.0, %v679
        %681 = vdwg.mxu0
        %v682 = vpack.c.bf16 %v680, %v678
        %s683 = scalar_lea.vmem %s4, 8
        %v684 = vld [vmem:[%s683] sm:$0xf]
        %v686 = vsel %vm615, %v682, 0
        %v689 = vsel %vm619, %v684, 0
        %691 = vmatpush.bf16.msra.mxu0 0
        %692 = vmatpush.bf16.msra.mxu0 0
        %693 = vmatpush.bf16.msra.mxu0 0
        %694 = vmatpush.bf16.msra.mxu0 0
        %695 = vmatpush.bf16.msra.mxu0 0
        %696 = vmatpush.bf16.msra.mxu0 0
        %697 = vmatpush.bf16.msra.mxu0 0
        %698 = vmatpush.bf16.msra.mxu0 %v689
        %699 = vmatmul.bf16.gmra.mxu0 %v686
        %v700 = vpop.f32.mrf.mxu0
        %v701 = vadd.f32 0.0, %v700
        %v702 = vpop.f32.mrf.mxu0
        %v703 = vadd.f32 0.0, %v702
        %704 = vdwg.mxu0
        %v705 = vadd.f32 %v653, %v701
        %v706 = vadd.f32 %v655, %v703
        %s707 = scalar_lea.vmem %s3, 24
        %v708 = vld [vmem:[%s707] sm:$0xf]
        %v709 = vld [vmem:[%s707 + $0x4] sm:$0x1]
        %v712 = vunpack.c.l.b16 %v708
        %v713 = vunpack.c.l.b16 %v709
        %v714 = vpack.c.b16 %v713, %v712
        %v716 = vsel %vm561, %v714, 0
        %718 = vmatpush.bf16.msra.mxu0 0
        %719 = vmatpush.bf16.msra.mxu0 0
        %720 = vmatpush.bf16.msra.mxu0 0
        %721 = vmatpush.bf16.msra.mxu0 0
        %722 = vmatpush.bf16.msra.mxu0 %v569
        %723 = vmatpush.bf16.msra.mxu0 %v552
        %724 = vmatpush.bf16.msra.mxu0 %v551
        %725 = vmatpush.bf16.msra.mxu0 %v550
        %726 = vmatmul.bf16.gmra.mxu0 %v716
        %v727 = vpop.f32.mrf.mxu0
        %v728 = vadd.f32 0.0, %v727
        %v729 = vpop.f32.mrf.mxu0
        %v730 = vadd.f32 0.0, %v729
        %731 = vdwg.mxu0
        %v732 = vpack.c.bf16 %v730, %v728
        %s733 = scalar_lea.vmem %s4, 12
        %v734 = vld [vmem:[%s733] sm:$0xf]
        %v736 = vsel %vm615, %v732, 0
        %v739 = vsel %vm619, %v734, 0
        %741 = vmatpush.bf16.msra.mxu0 0
        %742 = vmatpush.bf16.msra.mxu0 0
        %743 = vmatpush.bf16.msra.mxu0 0
        %744 = vmatpush.bf16.msra.mxu0 0
        %745 = vmatpush.bf16.msra.mxu0 0
        %746 = vmatpush.bf16.msra.mxu0 0
        %747 = vmatpush.bf16.msra.mxu0 0
        %748 = vmatpush.bf16.msra.mxu0 %v739
        %749 = vmatmul.bf16.gmra.mxu0 %v736
        %v750 = vpop.f32.mrf.mxu0
        %v751 = vadd.f32 0.0, %v750
        %v752 = vpop.f32.mrf.mxu0
        %v753 = vadd.f32 0.0, %v752
        %754 = vdwg.mxu0
        %v755 = vadd.f32 %v705, %v751
        %v756 = vadd.f32 %v706, %v753
        %s757 = scalar_lea.vmem %s3, 32
        %v758 = vld [vmem:[%s757] sm:$0xf]
        %v759 = vld [vmem:[%s757 + $0x4] sm:$0x1]
        %v762 = vunpack.c.l.b16 %v758
        %v763 = vunpack.c.l.b16 %v759
        %v764 = vpack.c.b16 %v763, %v762
        %v766 = vsel %vm561, %v764, 0
        %768 = vmatpush.bf16.msra.mxu0 0
        %769 = vmatpush.bf16.msra.mxu0 0
        %770 = vmatpush.bf16.msra.mxu0 0
        %771 = vmatpush.bf16.msra.mxu0 0
        %772 = vmatpush.bf16.msra.mxu0 %v569
        %773 = vmatpush.bf16.msra.mxu0 %v552
        %774 = vmatpush.bf16.msra.mxu0 %v551
        %775 = vmatpush.bf16.msra.mxu0 %v550
        %776 = vmatmul.bf16.gmra.mxu0 %v766
        %v777 = vpop.f32.mrf.mxu0
        %v778 = vadd.f32 0.0, %v777
        %v779 = vpop.f32.mrf.mxu0
        %v780 = vadd.f32 0.0, %v779
        %781 = vdwg.mxu0
        %v782 = vpack.c.bf16 %v780, %v778
        %s783 = scalar_lea.vmem %s4, 16
        %v784 = vld [vmem:[%s783] sm:$0xf]
        %v786 = vsel %vm615, %v782, 0
        %v789 = vsel %vm619, %v784, 0
        %791 = vmatpush.bf16.msra.mxu0 0
        %792 = vmatpush.bf16.msra.mxu0 0
        %793 = vmatpush.bf16.msra.mxu0 0
        %794 = vmatpush.bf16.msra.mxu0 0
        %795 = vmatpush.bf16.msra.mxu0 0
        %796 = vmatpush.bf16.msra.mxu0 0
        %797 = vmatpush.bf16.msra.mxu0 0
        %798 = vmatpush.bf16.msra.mxu0 %v789
        %799 = vmatmul.bf16.gmra.mxu0 %v786
        %v800 = vpop.f32.mrf.mxu0
        %v801 = vadd.f32 0.0, %v800
        %v802 = vpop.f32.mrf.mxu0
        %v803 = vadd.f32 0.0, %v802
        %804 = vdwg.mxu0
        %v805 = vadd.f32 %v755, %v801
        %v806 = vadd.f32 %v756, %v803
        %s807 = scalar_lea.vmem %s3, 40
        %v808 = vld [vmem:[%s807] sm:$0xf]
        %v809 = vld [vmem:[%s807 + $0x4] sm:$0x1]
        %v812 = vunpack.c.l.b16 %v808
        %v813 = vunpack.c.l.b16 %v809
        %v814 = vpack.c.b16 %v813, %v812
        %v816 = vsel %vm561, %v814, 0
        %818 = vmatpush.bf16.msra.mxu0 0
        %819 = vmatpush.bf16.msra.mxu0 0
        %820 = vmatpush.bf16.msra.mxu0 0
        %821 = vmatpush.bf16.msra.mxu0 0
        %822 = vmatpush.bf16.msra.mxu0 %v569
        %823 = vmatpush.bf16.msra.mxu0 %v552
        %824 = vmatpush.bf16.msra.mxu0 %v551
        %825 = vmatpush.bf16.msra.mxu0 %v550
        %826 = vmatmul.bf16.gmra.mxu0 %v816
        %v827 = vpop.f32.mrf.mxu0
        %v828 = vadd.f32 0.0, %v827
        %v829 = vpop.f32.mrf.mxu0
        %v830 = vadd.f32 0.0, %v829
        %831 = vdwg.mxu0
        %v832 = vpack.c.bf16 %v830, %v828
        %s833 = scalar_lea.vmem %s4, 20
        %v834 = vld [vmem:[%s833] sm:$0xf]
        %v836 = vsel %vm615, %v832, 0
        %v839 = vsel %vm619, %v834, 0
        %841 = vmatpush.bf16.msra.mxu0 0
        %842 = vmatpush.bf16.msra.mxu0 0
        %843 = vmatpush.bf16.msra.mxu0 0
        %844 = vmatpush.bf16.msra.mxu0 0
        %845 = vmatpush.bf16.msra.mxu0 0
        %846 = vmatpush.bf16.msra.mxu0 0
        %847 = vmatpush.bf16.msra.mxu0 0
        %848 = vmatpush.bf16.msra.mxu0 %v839
        %849 = vmatmul.bf16.gmra.mxu0 %v836
        %v850 = vpop.f32.mrf.mxu0
        %v851 = vadd.f32 0.0, %v850
        %v852 = vpop.f32.mrf.mxu0
        %v853 = vadd.f32 0.0, %v852
        %854 = vdwg.mxu0
        %v855 = vadd.f32 %v805, %v851
        %v856 = vadd.f32 %v806, %v853
        %s857 = scalar_lea.vmem %s3, 48
        %v858 = vld [vmem:[%s857] sm:$0xf]
        %v859 = vld [vmem:[%s857 + $0x4] sm:$0x1]
        %v862 = vunpack.c.l.b16 %v858
        %v863 = vunpack.c.l.b16 %v859
        %v864 = vpack.c.b16 %v863, %v862
        %v866 = vsel %vm561, %v864, 0
        %868 = vmatpush.bf16.msra.mxu0 0
        %869 = vmatpush.bf16.msra.mxu0 0
        %870 = vmatpush.bf16.msra.mxu0 0
        %871 = vmatpush.bf16.msra.mxu0 0
        %872 = vmatpush.bf16.msra.mxu0 %v569
        %873 = vmatpush.bf16.msra.mxu0 %v552
        %874 = vmatpush.bf16.msra.mxu0 %v551
        %875 = vmatpush.bf16.msra.mxu0 %v550
        %876 = vmatmul.bf16.gmra.mxu0 %v866
        %v877 = vpop.f32.mrf.mxu0
        %v878 = vadd.f32 0.0, %v877
        %v879 = vpop.f32.mrf.mxu0
        %v880 = vadd.f32 0.0, %v879
        %881 = vdwg.mxu0
        %v882 = vpack.c.bf16 %v880, %v878
        %s883 = scalar_lea.vmem %s4, 24
        %v884 = vld [vmem:[%s883] sm:$0xf]
        %v886 = vsel %vm615, %v882, 0
        %v889 = vsel %vm619, %v884, 0
        %891 = vmatpush.bf16.msra.mxu0 0
        %892 = vmatpush.bf16.msra.mxu0 0
        %893 = vmatpush.bf16.msra.mxu0 0
        %894 = vmatpush.bf16.msra.mxu0 0
        %895 = vmatpush.bf16.msra.mxu0 0
        %896 = vmatpush.bf16.msra.mxu0 0
        %897 = vmatpush.bf16.msra.mxu0 0
        %898 = vmatpush.bf16.msra.mxu0 %v889
        %899 = vmatmul.bf16.gmra.mxu0 %v886
        %v900 = vpop.f32.mrf.mxu0
        %v901 = vadd.f32 0.0, %v900
        %v902 = vpop.f32.mrf.mxu0
        %v903 = vadd.f32 0.0, %v902
        %904 = vdwg.mxu0
        %v905 = vadd.f32 %v855, %v901
        %v906 = vadd.f32 %v856, %v903
        %s907 = scalar_lea.vmem %s3, 56
        %v908 = vld [vmem:[%s907] sm:$0xf]
        %v909 = vld [vmem:[%s907 + $0x4] sm:$0x1]
        %v912 = vunpack.c.l.b16 %v908
        %v913 = vunpack.c.l.b16 %v909
        %v914 = vpack.c.b16 %v913, %v912
        %v916 = vsel %vm561, %v914, 0
        %918 = vmatpush.bf16.msra.mxu0 0
        %919 = vmatpush.bf16.msra.mxu0 0
        %920 = vmatpush.bf16.msra.mxu0 0
        %921 = vmatpush.bf16.msra.mxu0 0
        %922 = vmatpush.bf16.msra.mxu0 %v569
        %923 = vmatpush.bf16.msra.mxu0 %v552
        %924 = vmatpush.bf16.msra.mxu0 %v551
        %925 = vmatpush.bf16.msra.mxu0 %v550
        %926 = vmatmul.bf16.gmra.mxu0 %v916
        %v927 = vpop.f32.mrf.mxu0
        %v928 = vadd.f32 0.0, %v927
        %v929 = vpop.f32.mrf.mxu0
        %v930 = vadd.f32 0.0, %v929
        %931 = vdwg.mxu0
        %v932 = vpack.c.bf16 %v930, %v928
        %s933 = scalar_lea.vmem %s4, 28
        %v934 = vld [vmem:[%s933] sm:$0xf]
        %v936 = vsel %vm615, %v932, 0
        %v939 = vsel %vm619, %v934, 0
        %941 = vmatpush.bf16.msra.mxu0 0
        %942 = vmatpush.bf16.msra.mxu0 0
        %943 = vmatpush.bf16.msra.mxu0 0
        %944 = vmatpush.bf16.msra.mxu0 0
        %945 = vmatpush.bf16.msra.mxu0 0
        %946 = vmatpush.bf16.msra.mxu0 0
        %947 = vmatpush.bf16.msra.mxu0 0
        %948 = vmatpush.bf16.msra.mxu0 %v939
        %949 = vmatmul.bf16.gmra.mxu0 %v936
        %v950 = vpop.f32.mrf.mxu0
        %v951 = vadd.f32 0.0, %v950
        %v952 = vpop.f32.mrf.mxu0
        %v953 = vadd.f32 0.0, %v952
        %954 = vdwg.mxu0
        %v955 = vadd.f32 %v905, %v951
        %v956 = vadd.f32 %v906, %v953
        %s957 = scalar_lea.vmem %s3, 64
        %v958 = vld [vmem:[%s957] sm:$0xf]
        %v959 = vld [vmem:[%s957 + $0x4] sm:$0x1]
        %v962 = vunpack.c.l.b16 %v958
        %v963 = vunpack.c.l.b16 %v959
        %v964 = vpack.c.b16 %v963, %v962
        %v966 = vsel %vm561, %v964, 0
        %968 = vmatpush.bf16.msra.mxu0 0
        %969 = vmatpush.bf16.msra.mxu0 0
        %970 = vmatpush.bf16.msra.mxu0 0
        %971 = vmatpush.bf16.msra.mxu0 0
        %972 = vmatpush.bf16.msra.mxu0 %v569
        %973 = vmatpush.bf16.msra.mxu0 %v552
        %974 = vmatpush.bf16.msra.mxu0 %v551
        %975 = vmatpush.bf16.msra.mxu0 %v550
        %976 = vmatmul.bf16.gmra.mxu0 %v966
        %v977 = vpop.f32.mrf.mxu0
        %v978 = vadd.f32 0.0, %v977
        %v979 = vpop.f32.mrf.mxu0
        %v980 = vadd.f32 0.0, %v979
        %981 = vdwg.mxu0
        %v982 = vpack.c.bf16 %v980, %v978
        %s983 = scalar_lea.vmem %s4, 32
        %v984 = vld [vmem:[%s983] sm:$0xf]
        %v986 = vsel %vm615, %v982, 0
        %v989 = vsel %vm619, %v984, 0
        %991 = vmatpush.bf16.msra.mxu0 0
        %992 = vmatpush.bf16.msra.mxu0 0
        %993 = vmatpush.bf16.msra.mxu0 0
        %994 = vmatpush.bf16.msra.mxu0 0
        %995 = vmatpush.bf16.msra.mxu0 0
        %996 = vmatpush.bf16.msra.mxu0 0
        %997 = vmatpush.bf16.msra.mxu0 0
        %998 = vmatpush.bf16.msra.mxu0 %v989
        %999 = vmatmul.bf16.gmra.mxu0 %v986
        %v1000 = vpop.f32.mrf.mxu0
        %v1001 = vadd.f32 0.0, %v1000
        %v1002 = vpop.f32.mrf.mxu0
        %v1003 = vadd.f32 0.0, %v1002
        %1004 = vdwg.mxu0
        %v1005 = vadd.f32 %v955, %v1001
        %v1006 = vadd.f32 %v956, %v1003
        %v1007 = vld [vmem:[%s5] sm:$0x1]
        %v1009 = vperm.slane %v1007, 0
        %v1011 = vadd.f32 %v1005, %v1009
        %v1012 = vadd.f32 %v1006, %v1009
        %v1013 = vmax.f32 %v1011, 0.0
        %v1014 = vmax.f32 %v1012, 0.0
        %v1015 = vpack.c.bf16 %v1013, %v1013
        %v1016 = vld [vmem:[%s6] sm:$0xf]
        %v1017 = vld [vmem:[%s6 + $0x4] sm:$0xf]
        %s1018 = scalar_lea.vmem %s6, 8
        %v1019 = vld [vmem:[%s1018] sm:$0xf]
        %v1020 = vld [vmem:[%s1018 + $0x4] sm:$0xf]
        %v1022 = vshrl.u32 %v1015, 16
        %v1026 = vunpack.c.l.b16 %v1019
        %v1027 = vunpack.c.l.b16 %v1020
        %v1028 = vpack.c.b16 %v1027, %v1026
        %v1031 = vsel %vm474, %v1022, 0
        %1033 = vmatpush.bf16.msra.mxu0 0
        %1034 = vmatpush.bf16.msra.mxu0 0
        %1035 = vmatpush.bf16.msra.mxu0 0
        %1036 = vmatpush.bf16.msra.mxu0 0
        %1037 = vmatpush.bf16.msra.mxu0 0
        %1038 = vmatpush.bf16.msra.mxu0 0
        %1039 = vmatpush.bf16.msra.mxu0 0
        %1040 = vmatpush.bf16.msra.mxu0 %v1028
        %1041 = vmatmul.bf16.gmra.mxu0 %v1031
        %v1042 = vpop.f32.mrf.mxu0
        %v1043 = vadd.f32 0.0, %v1042
        %v1044 = vpop.f32.mrf.mxu0
        %1045 = vdwg.mxu0
        %v1048 = vunpack.c.l.b16 %v1016
        %v1049 = vunpack.c.l.b16 %v1017
        %v1050 = vpack.c.b16 %v1049, %v1048
        %v1052 = vsel %vm474, %v1015, 0
        %1054 = vmatpush.bf16.msra.mxu0 0
        %1055 = vmatpush.bf16.msra.mxu0 0
        %1056 = vmatpush.bf16.msra.mxu0 0
        %1057 = vmatpush.bf16.msra.mxu0 0
        %1058 = vmatpush.bf16.msra.mxu0 0
        %1059 = vmatpush.bf16.msra.mxu0 0
        %1060 = vmatpush.bf16.msra.mxu0 0
        %1061 = vmatpush.bf16.msra.mxu0 %v1050
        %1062 = vmatmul.bf16.gmra.mxu0 %v1052
        %v1063 = vpop.f32.mrf.mxu0
        %v1064 = vadd.f32 %v1043, %v1063
        %v1065 = vpop.f32.mrf.mxu0
        %1066 = vdwg.mxu0
        %s1067 = scalar_lea.vmem %s6, 16
        %v1068 = vld [vmem:[%s1067] sm:$0xf]
        %v1069 = vld [vmem:[%s1067 + $0x4] sm:$0xf]
        %v1071 = vrot.slane %v1015, 1
        %v1074 = vunpack.c.l.b16 %v1068
        %v1075 = vunpack.c.l.b16 %v1069
        %v1076 = vpack.c.b16 %v1075, %v1074
        %v1079 = vsel %vm474, %v1071, 0
        %1081 = vmatpush.bf16.msra.mxu0 0
        %1082 = vmatpush.bf16.msra.mxu0 0
        %1083 = vmatpush.bf16.msra.mxu0 0
        %1084 = vmatpush.bf16.msra.mxu0 0
        %1085 = vmatpush.bf16.msra.mxu0 0
        %1086 = vmatpush.bf16.msra.mxu0 0
        %1087 = vmatpush.bf16.msra.mxu0 0
        %1088 = vmatpush.bf16.msra.mxu0 %v1076
        %1089 = vmatmul.bf16.gmra.mxu0 %v1079
        %v1090 = vpop.f32.mrf.mxu0
        %v1091 = vadd.f32 0.0, %v1090
        %v1092 = vpop.f32.mrf.mxu0
        %1093 = vdwg.mxu0
        %v1094 = vadd.f32 %v1064, %v1091
        %s1095 = scalar_lea.vmem %s6, 24
        %v1096 = vld [vmem:[%s1095] sm:$0xf]
        %v1097 = vld [vmem:[%s1095 + $0x4] sm:$0xf]
        %v1098 = vrot.slane %v1022, 1
        %v1101 = vunpack.c.l.b16 %v1096
        %v1102 = vunpack.c.l.b16 %v1097
        %v1103 = vpack.c.b16 %v1102, %v1101
        %v1106 = vsel %vm474, %v1098, 0
        %1108 = vmatpush.bf16.msra.mxu0 0
        %1109 = vmatpush.bf16.msra.mxu0 0
        %1110 = vmatpush.bf16.msra.mxu0 0
        %1111 = vmatpush.bf16.msra.mxu0 0
        %1112 = vmatpush.bf16.msra.mxu0 0
        %1113 = vmatpush.bf16.msra.mxu0 0
        %1114 = vmatpush.bf16.msra.mxu0 0
        %1115 = vmatpush.bf16.msra.mxu0 %v1103
        %1116 = vmatmul.bf16.gmra.mxu0 %v1106
        %v1117 = vpop.f32.mrf.mxu0
        %v1118 = vadd.f32 0.0, %v1117
        %v1119 = vpop.f32.mrf.mxu0
        %1120 = vdwg.mxu0
        %v1121 = vadd.f32 %v1094, %v1118
        %s1122 = scalar_lea.vmem %s6, 32
        %v1123 = vld [vmem:[%s1122] sm:$0xf]
        %v1124 = vld [vmem:[%s1122 + $0x4] sm:$0xf]
        %v1125 = vrot.slane %v1015, 2
        %v1128 = vunpack.c.l.b16 %v1123
        %v1129 = vunpack.c.l.b16 %v1124
        %v1130 = vpack.c.b16 %v1129, %v1128
        %v1133 = vsel %vm474, %v1125, 0
        %1135 = vmatpush.bf16.msra.mxu0 0
        %1136 = vmatpush.bf16.msra.mxu0 0
        %1137 = vmatpush.bf16.msra.mxu0 0
        %1138 = vmatpush.bf16.msra.mxu0 0
        %1139 = vmatpush.bf16.msra.mxu0 0
        %1140 = vmatpush.bf16.msra.mxu0 0
        %1141 = vmatpush.bf16.msra.mxu0 0
        %1142 = vmatpush.bf16.msra.mxu0 %v1130
        %1143 = vmatmul.bf16.gmra.mxu0 %v1133
        %v1144 = vpop.f32.mrf.mxu0
        %v1145 = vadd.f32 0.0, %v1144
        %v1146 = vpop.f32.mrf.mxu0
        %1147 = vdwg.mxu0
        %v1148 = vadd.f32 %v1121, %v1145
        %s1149 = scalar_lea.vmem %s6, 40
        %v1150 = vld [vmem:[%s1149] sm:$0xf]
        %v1151 = vld [vmem:[%s1149 + $0x4] sm:$0xf]
        %v1152 = vrot.slane %v1022, 2
        %v1155 = vunpack.c.l.b16 %v1150
        %v1156 = vunpack.c.l.b16 %v1151
        %v1157 = vpack.c.b16 %v1156, %v1155
        %v1160 = vsel %vm474, %v1152, 0
        %1162 = vmatpush.bf16.msra.mxu0 0
        %1163 = vmatpush.bf16.msra.mxu0 0
        %1164 = vmatpush.bf16.msra.mxu0 0
        %1165 = vmatpush.bf16.msra.mxu0 0
        %1166 = vmatpush.bf16.msra.mxu0 0
        %1167 = vmatpush.bf16.msra.mxu0 0
        %1168 = vmatpush.bf16.msra.mxu0 0
        %1169 = vmatpush.bf16.msra.mxu0 %v1157
        %1170 = vmatmul.bf16.gmra.mxu0 %v1160
        %v1171 = vpop.f32.mrf.mxu0
        %v1172 = vadd.f32 0.0, %v1171
        %v1173 = vpop.f32.mrf.mxu0
        %1174 = vdwg.mxu0
        %v1175 = vadd.f32 %v1148, %v1172
        %s1176 = scalar_lea.vmem %s6, 48
        %v1177 = vld [vmem:[%s1176] sm:$0xf]
        %v1178 = vld [vmem:[%s1176 + $0x4] sm:$0xf]
        %v1179 = vrot.slane %v1015, 3
        %v1182 = vunpack.c.l.b16 %v1177
        %v1183 = vunpack.c.l.b16 %v1178
        %v1184 = vpack.c.b16 %v1183, %v1182
        %v1187 = vsel %vm474, %v1179, 0
        %1189 = vmatpush.bf16.msra.mxu0 0
        %1190 = vmatpush.bf16.msra.mxu0 0
        %1191 = vmatpush.bf16.msra.mxu0 0
        %1192 = vmatpush.bf16.msra.mxu0 0
        %1193 = vmatpush.bf16.msra.mxu0 0
        %1194 = vmatpush.bf16.msra.mxu0 0
        %1195 = vmatpush.bf16.msra.mxu0 0
        %1196 = vmatpush.bf16.msra.mxu0 %v1184
        %1197 = vmatmul.bf16.gmra.mxu0 %v1187
        %v1198 = vpop.f32.mrf.mxu0
        %v1199 = vadd.f32 0.0, %v1198
        %v1200 = vpop.f32.mrf.mxu0
        %1201 = vdwg.mxu0
        %v1202 = vadd.f32 %v1175, %v1199
        %s1203 = scalar_lea.vmem %s6, 56
        %v1204 = vld [vmem:[%s1203] sm:$0xf]
        %v1205 = vld [vmem:[%s1203 + $0x4] sm:$0xf]
        %v1206 = vrot.slane %v1022, 3
        %v1209 = vunpack.c.l.b16 %v1204
        %v1210 = vunpack.c.l.b16 %v1205
        %v1211 = vpack.c.b16 %v1210, %v1209
        %v1214 = vsel %vm474, %v1206, 0
        %1216 = vmatpush.bf16.msra.mxu0 0
        %1217 = vmatpush.bf16.msra.mxu0 0
        %1218 = vmatpush.bf16.msra.mxu0 0
        %1219 = vmatpush.bf16.msra.mxu0 0
        %1220 = vmatpush.bf16.msra.mxu0 0
        %1221 = vmatpush.bf16.msra.mxu0 0
        %1222 = vmatpush.bf16.msra.mxu0 0
        %1223 = vmatpush.bf16.msra.mxu0 %v1211
        %1224 = vmatmul.bf16.gmra.mxu0 %v1214
        %v1225 = vpop.f32.mrf.mxu0
        %v1226 = vadd.f32 0.0, %v1225
        %v1227 = vpop.f32.mrf.mxu0
        %1228 = vdwg.mxu0
        %v1229 = vadd.f32 %v1202, %v1226
        %v1230 = vpack.c.bf16 %v1014, %v1014
        %s1231 = scalar_lea.vmem %s6, 64
        %v1232 = vld [vmem:[%s1231] sm:$0xf]
        %v1233 = vld [vmem:[%s1231 + $0x4] sm:$0xf]
        %v1236 = vunpack.c.l.b16 %v1232
        %v1237 = vunpack.c.l.b16 %v1233
        %v1238 = vpack.c.b16 %v1237, %v1236
        %v1241 = vsel %vm474, %v1230, 0
        %1243 = vmatpush.bf16.msra.mxu0 0
        %1244 = vmatpush.bf16.msra.mxu0 0
        %1245 = vmatpush.bf16.msra.mxu0 0
        %1246 = vmatpush.bf16.msra.mxu0 0
        %1247 = vmatpush.bf16.msra.mxu0 0
        %1248 = vmatpush.bf16.msra.mxu0 0
        %1249 = vmatpush.bf16.msra.mxu0 0
        %1250 = vmatpush.bf16.msra.mxu0 %v1238
        %1251 = vmatmul.bf16.gmra.mxu0 %v1241
        %v1252 = vpop.f32.mrf.mxu0
        %v1253 = vadd.f32 0.0, %v1252
        %v1254 = vpop.f32.mrf.mxu0
        %1255 = vdwg.mxu0
        %v1256 = vadd.f32 %v1229, %v1253
        %v1257 = vld [vmem:[%s7] sm:$0x1]
        %v1258 = vadd.f32 %v1256, %v1257
        %v1259 = vmax.f32 %v1258, 0.0
        %v1260 = vpack.c.bf16 %v1259, %v1259
        %v1261 = vld [vmem:[%s8] sm:$0xf]
        %v1262 = vld [vmem:[%s8 + $0x4] sm:$0xf]
        %v1263 = vld [vmem:[%s8 + $0x8] sm:$0xf]
        %v1264 = vld [vmem:[%s8 + $0xc] sm:$0xf]
        %v1265 = vld [vmem:[%s9] sm:$0x1]
        %v1270 = vunpack.c.l.b16 %v1261
        %v1271 = vunpack.c.l.b16 %v1262
        %v1272 = vunpack.c.l.b16 %v1263
        %v1273 = vunpack.c.l.b16 %v1264
        %v1274 = vpack.c.b16 %v1271, %v1270
        %v1275 = vpack.c.b16 %v1273, %v1272
        %vm1278 = vcmask 261120
        %v1280 = vsel %vm1278, %v1260, 0
        %1282 = vmatpush.bf16.msra.mxu0 0
        %1283 = vmatpush.bf16.msra.mxu0 0
        %1284 = vmatpush.bf16.msra.mxu0 0
        %1285 = vmatpush.bf16.msra.mxu0 0
        %1286 = vmatpush.bf16.msra.mxu0 0
        %1287 = vmatpush.bf16.msra.mxu0 0
        %1288 = vmatpush.bf16.msra.mxu0 %v1275
        %1289 = vmatpush.bf16.msra.mxu0 %v1274
        %1290 = vmatmul.bf16.gmra.mxu0 %v1280
        %v1291 = vpop.f32.mrf.mxu0
        %v1292 = vadd.f32 %v1265, %v1291
        %v1293 = vpop.f32.mrf.mxu0
        %1294 = vdwg.mxu0
        %vm1295 = vcmask 40960
        %1296 = vst.msk [vmem:[%s351] sm:$0x1] %vm1295, %v1292
        %s1297 = sand.u32 %s247, 1
        %s1298 = scalar_lea.sflag [#allocation3], %s1297
        %s1299 = sand.u32 %s247, 1
        %s1300 = scalar_lea.vmem [#allocation2], %s1299
        // Predicated region
        $region61: #{a_call__.1} parent=59 // pred_check
          %p1301 = pneg %p257
        $region62: #{a_call__.1} parent=59 // pred_check_branch
          %1303 = sbr.rel (%p1301) target = $region64
        $region63: #{a_call__.1} parent=59 // pred_region
          %1305 = vsyncadd %s1298, 0
          %s1306 = scalar_lea.hbm %s10, %s24
          %s1308 = sshll.u32 %s1300, 4
          %s1309 = int_to_ptr.vmem [resolvable:$true] %s1308
          %s1310 = sshll.u32 %s1306, 4
          %s1311 = int_to_ptr.hbm [resolvable:$true] %s1310
          %1313 = dma.vmem_to_hbm [thread:$0]  %s1309, 16, %s1311, %s1298
        $region64: #{a_call__.1} parent=59 // pred_fallthru
          _
      $region60: #{a_call__.1} parent=5 // pred_fallthru
        _
      %p1314 = scmp.le.s32.totalorder 2, %s19
      // Predicated region
      $region65: #{a_call__.1} parent=5 // pred_check
        %p1315 = pneg %p1314
      $region66: #{a_call__.1} parent=5 // pred_check_branch
        %1317 = sbr.rel (%p1315) target = $region68
      $region67: #{a_call__.1} parent=5 // pred_region
        %s1318 = ssub.s32 %s19, 2
        // Predicated region
        $region69: #{a_call__.1} parent=67 // pred_check
          %p1319 = pneg %p263
        $region70: #{a_call__.1} parent=67 // pred_check_branch
          %1321 = sbr.rel (%p1319) target = $region72
        $region71: #{a_call__.1} parent=67 // pred_region
          %s1322 = sand.u32 %s248, 1
          %s1323 = scalar_lea.sflag [#allocation3], %s1322
          %s1324 = sand.u32 %s248, 1
          %s1325 = scalar_lea.vmem [#allocation2], %s1324
          %1327 = dma.done %s1323, 16
        $region72: #{a_call__.1} parent=67 // pred_fallthru
          _
      $region68: #{a_call__.1} parent=5 // pred_fallthru
        _
    $region6: #{a_call__.1} parent=1 // loop_footer
      %s23 = sadd.s32 1, %s19
    $region7: #{a_call__.1} parent=1 // loop_footer_branch
      %18 = sbr.rel target = $region3
    $region8: #{a_call__.1} parent=1 // loop_exit
      _
    %1328 = vsyncpa [#allocation3], 1
    %s1329 = scalar_lea.sflag [#allocation3], 1
    %1330 = vsyncpa %s1329, 1

</llo_original>
